<compile_context>
chip_gen: v5e
topology: v5e:2x2
jax: 0.10.0
libtpu: 0.0.40
codegen_flags: <defaults>
</compile_context>

<pallas_src>
import functools

import jax
import jax.numpy as jnp
import numpy as np
from jax.experimental import pallas as pl
from jax.experimental.pallas import tpu as pltpu


def _xconv_kernel(TM, K, mid, cin, cout,
                  p_mlp_ref,      # (1, K, TM, 3)    p_hat, neighbor-major
                  p_stn_ref,      # (1, TM, 3K)      p_hat flat (k-major, xyz-minor)
                  feat_ref,       # (1, K, TM, cin)  gathered input features
                  w1_ref, b1_ref, w2_ref, b2_ref,                        # mlp (BN folded)
                  ws1_ref, bs1_ref, ws2_ref, bs2_ref, ws3_ref, bs3_ref,  # stn
                  wch_ref, wcf_ref, bc_ref,                              # final conv (BN folded)
                  out_ref):       # (1, TM, cout)
    f32 = jnp.float32

    # ---- mlp: lift p_hat (3) -> mid features, per neighbor j ----------------
    w1 = w1_ref[...].astype(f32)          # (3, mid)
    b1 = b1_ref[...].astype(f32)          # (1, mid)
    w2 = w2_ref[...].astype(f32)          # (mid, mid)
    b2 = b2_ref[...].astype(f32)          # (1, mid)
    h_js = []
    for j in range(K):
        pj = p_mlp_ref[0, j, :, :].astype(f32)          # (TM, 3)
        # 1x1 conv with 3 input channels as 3 VPU broadcast-FMAs.
        h1 = (pj[:, 0:1] * w1[0:1, :] + pj[:, 1:2] * w1[1:2, :]
              + pj[:, 2:3] * w1[2:3, :] + b1)
        h1 = jnp.maximum(h1, 0.0)
        h2 = jnp.dot(h1, w2, preferred_element_type=f32) + b2
        h_js.append(jnp.maximum(h2, 0.0))               # (TM, mid)

    # ---- stn: X-transform coefficients T[m, i*K + j] -------------------------
    pf = p_stn_ref[0].astype(f32)                       # (TM, 3K)
    t = jnp.maximum(jnp.dot(pf, ws1_ref[...], preferred_element_type=f32)
                    + bs1_ref[...], 0.0)
    t = jnp.maximum(jnp.dot(t, ws2_ref[...], preferred_element_type=f32)
                    + bs2_ref[...], 0.0)
    t = jnp.dot(t, ws3_ref[...], preferred_element_type=f32) + bs3_ref[...]  # (TM, K*K)

    # ---- X-transform (VPU broadcast-FMAs) + final [1,K] conv (MXU) ----------
    acc = jnp.zeros((TM, cout), f32)
    for i in range(K):
        base = i * K
        c0 = t[:, base:base + 1]                          # (TM, 1) lane-broadcast
        xt_h = c0 * h_js[0]                               # (TM, mid)
        xt_f = c0 * feat_ref[0, 0, :, :].astype(f32)      # (TM, cin)
        for j in range(1, K):
            cj = t[:, base + j:base + j + 1]
            xt_h = xt_h + cj * h_js[j]
            xt_f = xt_f + cj * feat_ref[0, j, :, :].astype(f32)
        acc = acc + jnp.dot(xt_h, wch_ref[i], preferred_element_type=f32)
        acc = acc + jnp.dot(xt_f, wcf_ref[i], preferred_element_type=f32)

    out_ref[0] = jnp.maximum(acc + bc_ref[...], 0.0).astype(out_ref.dtype)


def init_xconv_params(key, in_channels, out_channels, kernel_size, eps=1e-5):
    """Deterministic synthetic params; conv+BN folded, weights pre-transposed."""
    mid = out_channels // 4
    K = kernel_size
    cin = in_channels

    def conv_bn(k, out_c, in_c, kw, with_bn=True):
        ks = jax.random.split(k, 6)
        w = 0.1 * jax.random.normal(ks[0], (out_c, in_c, kw), jnp.float32)
        b = 0.1 * jax.random.normal(ks[1], (out_c,), jnp.float32)
        if with_bn:
            gamma = 1.0 + 0.1 * jax.random.normal(ks[2], (out_c,), jnp.float32)
            beta = 0.1 * jax.random.normal(ks[3], (out_c,), jnp.float32)
            mean = 0.1 * jax.random.normal(ks[4], (out_c,), jnp.float32)
            var = 1.0 + 0.1 * jnp.abs(jax.random.normal(ks[5], (out_c,), jnp.float32))
            scale = gamma * jax.lax.rsqrt(var + eps)
            shift = beta - mean * scale
            w = w * scale[:, None, None]
            b = b * scale + shift
        # (out, in, kw) -> (kw, in, out) -> (kw*in, out): pre-transposed so every
        # in-kernel matmul is data @ weight (no in-kernel .T / XLU relayout).
        w_t = jnp.transpose(w, (2, 1, 0)).reshape(kw * in_c, out_c)
        return w_t, b.reshape(1, out_c)

    ks = jax.random.split(key, 6)
    w1, b1 = conv_bn(ks[0], mid, 3, 1)                    # (3, mid)
    w2, b2 = conv_bn(ks[1], mid, mid, 1)                  # (mid, mid)
    ws1, bs1 = conv_bn(ks[2], K * K, 3, K)                # (3K, K^2)
    ws2, bs2 = conv_bn(ks[3], K * K, K * K, 1)            # (K^2, K^2)
    ws3, bs3 = conv_bn(ks[4], K * K, K * K, 1, with_bn=False)
    wc, bc = conv_bn(ks[5], out_channels, cin + mid, K)   # (K*(mid+cin), cout)
    # Split the final conv weight per kernel-width position and per
    # (lifted h | gathered feat) channel block -> no in-kernel concat/flatten.
    wc3 = wc.reshape(K, mid + cin, out_channels)
    wch = wc3[:, :mid, :]                                 # (K, mid, cout)
    wcf = wc3[:, mid:, :]                                 # (K, cin, cout)
    return (w1, b1, w2, b2, ws1, bs1, ws2, bs2, ws3, bs3, wch, wcf, bc)


def _prepare_neighborhoods(p, q, x, K, dilation):
    """kNN + gather glue (plain JAX): F.knn + batched_index_select."""
    d2 = jnp.sum((q[:, :, None, :] - p[:, None, :, :]) ** 2, axis=-1)  # (B, M, N)
    _, idx = jax.lax.top_k(-d2, K * dilation)
    idx = idx[..., ::dilation]                                         # (B, M, K)
    gather = jax.vmap(lambda arr, ind: arr[ind])
    p_g = gather(p, idx)                                               # (B, M, K, 3)
    feat = gather(jnp.transpose(x, (0, 2, 1)), idx)                    # (B, M, K, Cin)
    p_hat = p_g - q[:, :, None, :]                                     # (B, M, K, 3)
    return p_hat, feat


def _choose_tm(M, K, cin, mid, cout, budget_bytes=16 * 1024 * 1024):
    """Largest query-tile TM (multiple of 8, dividing M) fitting a VMEM budget."""
    def tile_bytes(tm):
        io = tm * K * (3 + cin) + tm * 3 * K + tm * cout        # inputs + output
        live = tm * K * mid + tm * K * K + tm * (mid + cin + cout)
        return 4 * (2 * io + live)                              # double-buffered I/O
    for cand in (512, 256, 128, 64, 32, 16, 8):
        if M % cand == 0 and tile_bytes(cand) <= budget_bytes:
            return cand
    return M  # full extent is always a legal block size


def xconv_forward(params, p, q, x, kernel_size, out_channels, dilation=1):
    (w1, b1, w2, b2, ws1, bs1, ws2, bs2, ws3, bs3, wch, wcf, bc) = params
    B = p.shape[0]
    M = q.shape[1]
    K = kernel_size
    cin = x.shape[1]
    mid = out_channels // 4

    p_hat, feat = _prepare_neighborhoods(p, q, x, K, dilation)
    # Wrapper-side layout plumbing so the kernel never remaps sublane<->lane:
    p_mlp = jnp.transpose(p_hat, (0, 2, 1, 3))           # (B, K, M, 3)
    p_stn = p_hat.reshape(B, M, K * 3)                   # (B, M, 3K)
    feat_k = jnp.transpose(feat, (0, 2, 1, 3))           # (B, K, M, cin)

    TM = _choose_tm(M, K, cin, mid, out_channels)
    grid = (B, M // TM)

    kernel = functools.partial(_xconv_kernel, TM, K, mid, cin, out_channels)
    weights = (w1, b1, w2, b2, ws1, bs1, ws2, bs2, ws3, bs3, wch, wcf, bc)

    def _const_spec(w):
        zeros = (0,) * w.ndim
        return pl.BlockSpec(w.shape, lambda b, m, _z=zeros: _z)

    in_specs = [
        pl.BlockSpec((1, K, TM, 3), lambda b, m: (b, 0, m, 0)),
        pl.BlockSpec((1, TM, K * 3), lambda b, m: (b, m, 0)),
        pl.BlockSpec((1, K, TM, cin), lambda b, m: (b, 0, m, 0)),
    ] + [_const_spec(w) for w in weights]
    out_spec = pl.BlockSpec((1, TM, out_channels), lambda b, m: (b, m, 0))

    y = pl.pallas_call(
        kernel,
        out_shape=jax.ShapeDtypeStruct((B, M, out_channels), jnp.float32),
        grid=grid,
        in_specs=in_specs,
        out_specs=out_spec,
        compiler_params=pltpu.CompilerParams(
            dimension_semantics=("parallel", "parallel"),
            vmem_limit_bytes=48 * 1024 * 1024,   # explicit headroom, < v7x 64 MiB
        ),
    )(p_mlp, p_stn, feat_k, *weights)

    # Match PyTorch output layout (B, C_out, M); torch returns (q, x).
    return q, jnp.transpose(y, (0, 2, 1))


def xconv_ref(params, p, q, x, kernel_size, out_channels, dilation=1):
    """Pure-JAX reference with the original concat/einsum/flatten formulation."""
    (w1, b1, w2, b2, ws1, bs1, ws2, bs2, ws3, bs3, wch, wcf, bc) = params
    K = kernel_size
    mid = out_channels // 4
    cin = x.shape[1]
    p_hat, feat = _prepare_neighborhoods(p, q, x, K, dilation)
    B, M = p_hat.shape[:2]
    a = p_hat.reshape(B, M * K, 3)
    h = jnp.maximum(a @ w1 + b1, 0.0)
    h = jnp.maximum(h @ w2 + b2, 0.0)
    x_hat = jnp.concatenate([h.reshape(B, M, K, mid), feat], axis=-1)
    pf = p_hat.reshape(B, M, K * 3)
    t = jnp.maximum(pf @ ws1 + bs1, 0.0)
    t = jnp.maximum(t @ ws2 + bs2, 0.0)
    t = t @ ws3 + bs3
    T = t.reshape(B, M, K, K)
    xt = jnp.einsum('bmij,bmjc->bmic', T, x_hat)
    wc_full = jnp.concatenate([wch, wcf], axis=1).reshape(K * (mid + cin), out_channels)
    o = jnp.maximum(xt.reshape(B, M, K * (mid + cin)) @ wc_full + bc, 0.0)
    return q, jnp.transpose(o, (0, 2, 1))


if __name__ == "__main__":
    B, N, M = 2, 16, 8
    in_channels, out_channels, kernel_size = 4, 8, 4

    key = jax.random.PRNGKey(0)
    kp, kx, kparam = jax.random.split(key, 3)
    p = jax.random.normal(kp, (B, N, 3), jnp.float32)            # point cloud
    q = p[:, :M, :]                                              # query points
    x = jax.random.normal(kx, (B, in_channels, N), jnp.float32)  # features (NCW)

    params = init_xconv_params(kparam, in_channels, out_channels, kernel_size)

    q_out, y = xconv_forward(params, p, q, x, kernel_size, out_channels)
    y = jax.block_until_ready(y)

    _, y_ref = xconv_ref(params, p, q, x, kernel_size, out_channels)
    np.testing.assert_allclose(np.asarray(y), np.asarray(y_ref), rtol=2e-3, atol=2e-3)
    assert y.shape == (B, out_channels, M) and q_out.shape == (B, M, 3)
    print("KERNEL_OK")
</pallas_src>

<mosaic_0001>
module attributes {stable_mosaic.version = 11 : i64} {
  func.func @_xconv_kernel(%arg0: i32, %arg1: i32, %arg2: memref<1x4x8x3xf32, #tpu.memory_space<vmem>>, %arg3: memref<1x8x12xf32, #tpu.memory_space<vmem>>, %arg4: memref<1x4x8x4xf32, #tpu.memory_space<vmem>>, %arg5: memref<3x2xf32, #tpu.memory_space<vmem>>, %arg6: memref<1x2xf32, #tpu.memory_space<vmem>>, %arg7: memref<2x2xf32, #tpu.memory_space<vmem>>, %arg8: memref<1x2xf32, #tpu.memory_space<vmem>>, %arg9: memref<12x16xf32, #tpu.memory_space<vmem>>, %arg10: memref<1x16xf32, #tpu.memory_space<vmem>>, %arg11: memref<16x16xf32, #tpu.memory_space<vmem>>, %arg12: memref<1x16xf32, #tpu.memory_space<vmem>>, %arg13: memref<16x16xf32, #tpu.memory_space<vmem>>, %arg14: memref<1x16xf32, #tpu.memory_space<vmem>>, %arg15: memref<4x2x8xf32, #tpu.memory_space<vmem>>, %arg16: memref<4x4x8xf32, #tpu.memory_space<vmem>>, %arg17: memref<1x8xf32, #tpu.memory_space<vmem>>, %arg18: memref<1x8x8xf32, #tpu.memory_space<vmem>>) attributes {dimension_semantics = [#tpu.dimension_semantics<parallel>, #tpu.dimension_semantics<parallel>], iteration_bounds = array<i64: 2, 1>, scalar_prefetch = 0 : i64, scratch_operands = 0 : i64, tpu.core_type = #tpu.core_type<tc>, window_params = [{transform_indices = @transform_0, window_bounds = array<i64: 1, 4, 8, 3>}, {transform_indices = @transform_1, window_bounds = array<i64: 1, 8, 12>}, {transform_indices = @transform_2, window_bounds = array<i64: 1, 4, 8, 4>}, {pipeline_mode = #tpu.pipeline_mode<synchronous>, transform_indices = @transform_3, window_bounds = array<i64: 3, 2>}, {pipeline_mode = #tpu.pipeline_mode<synchronous>, transform_indices = @transform_4, window_bounds = array<i64: 1, 2>}, {pipeline_mode = #tpu.pipeline_mode<synchronous>, transform_indices = @transform_5, window_bounds = array<i64: 2, 2>}, {pipeline_mode = #tpu.pipeline_mode<synchronous>, transform_indices = @transform_6, window_bounds = array<i64: 1, 2>}, {pipeline_mode = #tpu.pipeline_mode<synchronous>, transform_indices = @transform_7, window_bounds = array<i64: 12, 16>}, {pipeline_mode = #tpu.pipeline_mode<synchronous>, transform_indices = @transform_8, window_bounds = array<i64: 1, 16>}, {pipeline_mode = #tpu.pipeline_mode<synchronous>, transform_indices = @transform_9, window_bounds = array<i64: 16, 16>}, {pipeline_mode = #tpu.pipeline_mode<synchronous>, transform_indices = @transform_10, window_bounds = array<i64: 1, 16>}, {pipeline_mode = #tpu.pipeline_mode<synchronous>, transform_indices = @transform_11, window_bounds = array<i64: 16, 16>}, {pipeline_mode = #tpu.pipeline_mode<synchronous>, transform_indices = @transform_12, window_bounds = array<i64: 1, 16>}, {pipeline_mode = #tpu.pipeline_mode<synchronous>, transform_indices = @transform_13, window_bounds = array<i64: 4, 2, 8>}, {pipeline_mode = #tpu.pipeline_mode<synchronous>, transform_indices = @transform_14, window_bounds = array<i64: 4, 4, 8>}, {pipeline_mode = #tpu.pipeline_mode<synchronous>, transform_indices = @transform_15, window_bounds = array<i64: 1, 8>}, {transform_indices = @transform_16, window_bounds = array<i64: 1, 8, 8>}]} {
    %c0 = arith.constant 0 : index
    %c0_0 = arith.constant 0 : index
    %0 = vector.load %arg5[%c0, %c0_0] : memref<3x2xf32, #tpu.memory_space<vmem>>, vector<3x2xf32>
    %c0_1 = arith.constant 0 : index
    %c0_2 = arith.constant 0 : index
    %1 = vector.load %arg6[%c0_1, %c0_2] : memref<1x2xf32, #tpu.memory_space<vmem>>, vector<1x2xf32>
    %c0_3 = arith.constant 0 : index
    %c0_4 = arith.constant 0 : index
    %2 = vector.load %arg7[%c0_3, %c0_4] : memref<2x2xf32, #tpu.memory_space<vmem>>, vector<2x2xf32>
    %c0_5 = arith.constant 0 : index
    %c0_6 = arith.constant 0 : index
    %3 = vector.load %arg8[%c0_5, %c0_6] : memref<1x2xf32, #tpu.memory_space<vmem>>, vector<1x2xf32>
    %c0_7 = arith.constant 0 : index
    %c0_8 = arith.constant 0 : index
    %c0_9 = arith.constant 0 : index
    %c0_10 = arith.constant 0 : index
    %4 = vector.load %arg2[%c0_7, %c0_8, %c0_9, %c0_10] : memref<1x4x8x3xf32, #tpu.memory_space<vmem>>, vector<1x1x8x3xf32>
    %5 = vector.shape_cast %4 : vector<1x1x8x3xf32> to vector<8x3xf32>
    %6 = vector.extract_strided_slice %5 {offsets = [0, 0], sizes = [8, 1], strides = [1, 1]} : vector<8x3xf32> to vector<8x1xf32>
    %7 = vector.extract_strided_slice %0 {offsets = [0, 0], sizes = [1, 2], strides = [1, 1]} : vector<3x2xf32> to vector<1x2xf32>
    %8 = vector.broadcast %6 : vector<8x1xf32> to vector<8x2xf32>
    %9 = vector.broadcast %7 : vector<1x2xf32> to vector<8x2xf32>
    %10 = arith.mulf %8, %9 : vector<8x2xf32>
    %11 = vector.extract_strided_slice %5 {offsets = [0, 1], sizes = [8, 1], strides = [1, 1]} : vector<8x3xf32> to vector<8x1xf32>
    %12 = vector.extract_strided_slice %0 {offsets = [1, 0], sizes = [1, 2], strides = [1, 1]} : vector<3x2xf32> to vector<1x2xf32>
    %13 = vector.broadcast %11 : vector<8x1xf32> to vector<8x2xf32>
    %14 = vector.broadcast %12 : vector<1x2xf32> to vector<8x2xf32>
    %15 = arith.mulf %13, %14 : vector<8x2xf32>
    %16 = arith.addf %10, %15 : vector<8x2xf32>
    %17 = vector.extract_strided_slice %5 {offsets = [0, 2], sizes = [8, 1], strides = [1, 1]} : vector<8x3xf32> to vector<8x1xf32>
    %18 = vector.extract_strided_slice %0 {offsets = [2, 0], sizes = [1, 2], strides = [1, 1]} : vector<3x2xf32> to vector<1x2xf32>
    %19 = vector.broadcast %17 : vector<8x1xf32> to vector<8x2xf32>
    %20 = vector.broadcast %18 : vector<1x2xf32> to vector<8x2xf32>
    %21 = arith.mulf %19, %20 : vector<8x2xf32>
    %22 = arith.addf %16, %21 : vector<8x2xf32>
    %23 = vector.broadcast %1 : vector<1x2xf32> to vector<8x2xf32>
    %24 = arith.addf %22, %23 : vector<8x2xf32>
    %cst = arith.constant 0.000000e+00 : f32
    %25 = vector.broadcast %cst : f32 to vector<8x2xf32>
    %26 = arith.maximumf %24, %25 : vector<8x2xf32>
    %cst_11 = arith.constant dense<0.000000e+00> : vector<8x2xf32>
    %27 = tpu.matmul %26, %2, %cst_11 {dimension_numbers = #tpu.dot_dimension_numbers<[1], [0], [0], [1], [0, 0, 1, 1], [], []>} : vector<8x2xf32>, vector<2x2xf32>, vector<8x2xf32> -> vector<8x2xf32>
    %28 = vector.broadcast %3 : vector<1x2xf32> to vector<8x2xf32>
    %29 = arith.addf %27, %28 : vector<8x2xf32>
    %cst_12 = arith.constant 0.000000e+00 : f32
    %30 = vector.broadcast %cst_12 : f32 to vector<8x2xf32>
    %31 = arith.maximumf %29, %30 : vector<8x2xf32>
    %c0_13 = arith.constant 0 : index
    %c1 = arith.constant 1 : index
    %c0_14 = arith.constant 0 : index
    %c0_15 = arith.constant 0 : index
    %32 = vector.load %arg2[%c0_13, %c1, %c0_14, %c0_15] : memref<1x4x8x3xf32, #tpu.memory_space<vmem>>, vector<1x1x8x3xf32>
    %33 = vector.shape_cast %32 : vector<1x1x8x3xf32> to vector<8x3xf32>
    %34 = vector.extract_strided_slice %33 {offsets = [0, 0], sizes = [8, 1], strides = [1, 1]} : vector<8x3xf32> to vector<8x1xf32>
    %35 = vector.extract_strided_slice %0 {offsets = [0, 0], sizes = [1, 2], strides = [1, 1]} : vector<3x2xf32> to vector<1x2xf32>
    %36 = vector.broadcast %34 : vector<8x1xf32> to vector<8x2xf32>
    %37 = vector.broadcast %35 : vector<1x2xf32> to vector<8x2xf32>
    %38 = arith.mulf %36, %37 : vector<8x2xf32>
    %39 = vector.extract_strided_slice %33 {offsets = [0, 1], sizes = [8, 1], strides = [1, 1]} : vector<8x3xf32> to vector<8x1xf32>
    %40 = vector.extract_strided_slice %0 {offsets = [1, 0], sizes = [1, 2], strides = [1, 1]} : vector<3x2xf32> to vector<1x2xf32>
    %41 = vector.broadcast %39 : vector<8x1xf32> to vector<8x2xf32>
    %42 = vector.broadcast %40 : vector<1x2xf32> to vector<8x2xf32>
    %43 = arith.mulf %41, %42 : vector<8x2xf32>
    %44 = arith.addf %38, %43 : vector<8x2xf32>
    %45 = vector.extract_strided_slice %33 {offsets = [0, 2], sizes = [8, 1], strides = [1, 1]} : vector<8x3xf32> to vector<8x1xf32>
    %46 = vector.extract_strided_slice %0 {offsets = [2, 0], sizes = [1, 2], strides = [1, 1]} : vector<3x2xf32> to vector<1x2xf32>
    %47 = vector.broadcast %45 : vector<8x1xf32> to vector<8x2xf32>
    %48 = vector.broadcast %46 : vector<1x2xf32> to vector<8x2xf32>
    %49 = arith.mulf %47, %48 : vector<8x2xf32>
    %50 = arith.addf %44, %49 : vector<8x2xf32>
    %51 = vector.broadcast %1 : vector<1x2xf32> to vector<8x2xf32>
    %52 = arith.addf %50, %51 : vector<8x2xf32>
    %cst_16 = arith.constant 0.000000e+00 : f32
    %53 = vector.broadcast %cst_16 : f32 to vector<8x2xf32>
    %54 = arith.maximumf %52, %53 : vector<8x2xf32>
    %cst_17 = arith.constant dense<0.000000e+00> : vector<8x2xf32>
    %55 = tpu.matmul %54, %2, %cst_17 {dimension_numbers = #tpu.dot_dimension_numbers<[1], [0], [0], [1], [0, 0, 1, 1], [], []>} : vector<8x2xf32>, vector<2x2xf32>, vector<8x2xf32> -> vector<8x2xf32>
    %56 = vector.broadcast %3 : vector<1x2xf32> to vector<8x2xf32>
    %57 = arith.addf %55, %56 : vector<8x2xf32>
    %cst_18 = arith.constant 0.000000e+00 : f32
    %58 = vector.broadcast %cst_18 : f32 to vector<8x2xf32>
    %59 = arith.maximumf %57, %58 : vector<8x2xf32>
    %c0_19 = arith.constant 0 : index
    %c2 = arith.constant 2 : index
    %c0_20 = arith.constant 0 : index
    %c0_21 = arith.constant 0 : index
    %60 = vector.load %arg2[%c0_19, %c2, %c0_20, %c0_21] : memref<1x4x8x3xf32, #tpu.memory_space<vmem>>, vector<1x1x8x3xf32>
    %61 = vector.shape_cast %60 : vector<1x1x8x3xf32> to vector<8x3xf32>
    %62 = vector.extract_strided_slice %61 {offsets = [0, 0], sizes = [8, 1], strides = [1, 1]} : vector<8x3xf32> to vector<8x1xf32>
    %63 = vector.extract_strided_slice %0 {offsets = [0, 0], sizes = [1, 2], strides = [1, 1]} : vector<3x2xf32> to vector<1x2xf32>
    %64 = vector.broadcast %62 : vector<8x1xf32> to vector<8x2xf32>
    %65 = vector.broadcast %63 : vector<1x2xf32> to vector<8x2xf32>
    %66 = arith.mulf %64, %65 : vector<8x2xf32>
    %67 = vector.extract_strided_slice %61 {offsets = [0, 1], sizes = [8, 1], strides = [1, 1]} : vector<8x3xf32> to vector<8x1xf32>
    %68 = vector.extract_strided_slice %0 {offsets = [1, 0], sizes = [1, 2], strides = [1, 1]} : vector<3x2xf32> to vector<1x2xf32>
    %69 = vector.broadcast %67 : vector<8x1xf32> to vector<8x2xf32>
    %70 = vector.broadcast %68 : vector<1x2xf32> to vector<8x2xf32>
    %71 = arith.mulf %69, %70 : vector<8x2xf32>
    %72 = arith.addf %66, %71 : vector<8x2xf32>
    %73 = vector.extract_strided_slice %61 {offsets = [0, 2], sizes = [8, 1], strides = [1, 1]} : vector<8x3xf32> to vector<8x1xf32>
    %74 = vector.extract_strided_slice %0 {offsets = [2, 0], sizes = [1, 2], strides = [1, 1]} : vector<3x2xf32> to vector<1x2xf32>
    %75 = vector.broadcast %73 : vector<8x1xf32> to vector<8x2xf32>
    %76 = vector.broadcast %74 : vector<1x2xf32> to vector<8x2xf32>
    %77 = arith.mulf %75, %76 : vector<8x2xf32>
    %78 = arith.addf %72, %77 : vector<8x2xf32>
    %79 = vector.broadcast %1 : vector<1x2xf32> to vector<8x2xf32>
    %80 = arith.addf %78, %79 : vector<8x2xf32>
    %cst_22 = arith.constant 0.000000e+00 : f32
    %81 = vector.broadcast %cst_22 : f32 to vector<8x2xf32>
    %82 = arith.maximumf %80, %81 : vector<8x2xf32>
    %cst_23 = arith.constant dense<0.000000e+00> : vector<8x2xf32>
    %83 = tpu.matmul %82, %2, %cst_23 {dimension_numbers = #tpu.dot_dimension_numbers<[1], [0], [0], [1], [0, 0, 1, 1], [], []>} : vector<8x2xf32>, vector<2x2xf32>, vector<8x2xf32> -> vector<8x2xf32>
    %84 = vector.broadcast %3 : vector<1x2xf32> to vector<8x2xf32>
    %85 = arith.addf %83, %84 : vector<8x2xf32>
    %cst_24 = arith.constant 0.000000e+00 : f32
    %86 = vector.broadcast %cst_24 : f32 to vector<8x2xf32>
    %87 = arith.maximumf %85, %86 : vector<8x2xf32>
    %c0_25 = arith.constant 0 : index
    %c3 = arith.constant 3 : index
    %c0_26 = arith.constant 0 : index
    %c0_27 = arith.constant 0 : index
    %88 = vector.load %arg2[%c0_25, %c3, %c0_26, %c0_27] : memref<1x4x8x3xf32, #tpu.memory_space<vmem>>, vector<1x1x8x3xf32>
    %89 = vector.shape_cast %88 : vector<1x1x8x3xf32> to vector<8x3xf32>
    %90 = vector.extract_strided_slice %89 {offsets = [0, 0], sizes = [8, 1], strides = [1, 1]} : vector<8x3xf32> to vector<8x1xf32>
    %91 = vector.extract_strided_slice %0 {offsets = [0, 0], sizes = [1, 2], strides = [1, 1]} : vector<3x2xf32> to vector<1x2xf32>
    %92 = vector.broadcast %90 : vector<8x1xf32> to vector<8x2xf32>
    %93 = vector.broadcast %91 : vector<1x2xf32> to vector<8x2xf32>
    %94 = arith.mulf %92, %93 : vector<8x2xf32>
    %95 = vector.extract_strided_slice %89 {offsets = [0, 1], sizes = [8, 1], strides = [1, 1]} : vector<8x3xf32> to vector<8x1xf32>
    %96 = vector.extract_strided_slice %0 {offsets = [1, 0], sizes = [1, 2], strides = [1, 1]} : vector<3x2xf32> to vector<1x2xf32>
    %97 = vector.broadcast %95 : vector<8x1xf32> to vector<8x2xf32>
    %98 = vector.broadcast %96 : vector<1x2xf32> to vector<8x2xf32>
    %99 = arith.mulf %97, %98 : vector<8x2xf32>
    %100 = arith.addf %94, %99 : vector<8x2xf32>
    %101 = vector.extract_strided_slice %89 {offsets = [0, 2], sizes = [8, 1], strides = [1, 1]} : vector<8x3xf32> to vector<8x1xf32>
    %102 = vector.extract_strided_slice %0 {offsets = [2, 0], sizes = [1, 2], strides = [1, 1]} : vector<3x2xf32> to vector<1x2xf32>
    %103 = vector.broadcast %101 : vector<8x1xf32> to vector<8x2xf32>
    %104 = vector.broadcast %102 : vector<1x2xf32> to vector<8x2xf32>
    %105 = arith.mulf %103, %104 : vector<8x2xf32>
    %106 = arith.addf %100, %105 : vector<8x2xf32>
    %107 = vector.broadcast %1 : vector<1x2xf32> to vector<8x2xf32>
    %108 = arith.addf %106, %107 : vector<8x2xf32>
    %cst_28 = arith.constant 0.000000e+00 : f32
    %109 = vector.broadcast %cst_28 : f32 to vector<8x2xf32>
    %110 = arith.maximumf %108, %109 : vector<8x2xf32>
    %cst_29 = arith.constant dense<0.000000e+00> : vector<8x2xf32>
    %111 = tpu.matmul %110, %2, %cst_29 {dimension_numbers = #tpu.dot_dimension_numbers<[1], [0], [0], [1], [0, 0, 1, 1], [], []>} : vector<8x2xf32>, vector<2x2xf32>, vector<8x2xf32> -> vector<8x2xf32>
    %112 = vector.broadcast %3 : vector<1x2xf32> to vector<8x2xf32>
    %113 = arith.addf %111, %112 : vector<8x2xf32>
    %cst_30 = arith.constant 0.000000e+00 : f32
    %114 = vector.broadcast %cst_30 : f32 to vector<8x2xf32>
    %115 = arith.maximumf %113, %114 : vector<8x2xf32>
    %c0_31 = arith.constant 0 : index
    %c0_32 = arith.constant 0 : index
    %c0_33 = arith.constant 0 : index
    %116 = vector.load %arg3[%c0_31, %c0_32, %c0_33] : memref<1x8x12xf32, #tpu.memory_space<vmem>>, vector<1x8x12xf32>
    %117 = vector.shape_cast %116 : vector<1x8x12xf32> to vector<8x12xf32>
    %c0_34 = arith.constant 0 : index
    %c0_35 = arith.constant 0 : index
    %118 = vector.load %arg9[%c0_34, %c0_35] : memref<12x16xf32, #tpu.memory_space<vmem>>, vector<12x16xf32>
    %cst_36 = arith.constant dense<0.000000e+00> : vector<8x16xf32>
    %119 = tpu.matmul %117, %118, %cst_36 {dimension_numbers = #tpu.dot_dimension_numbers<[1], [0], [0], [1], [0, 0, 1, 1], [], []>} : vector<8x12xf32>, vector<12x16xf32>, vector<8x16xf32> -> vector<8x16xf32>
    %c0_37 = arith.constant 0 : index
    %c0_38 = arith.constant 0 : index
    %120 = vector.load %arg10[%c0_37, %c0_38] : memref<1x16xf32, #tpu.memory_space<vmem>>, vector<1x16xf32>
    %121 = vector.broadcast %120 : vector<1x16xf32> to vector<8x16xf32>
    %122 = arith.addf %119, %121 : vector<8x16xf32>
    %cst_39 = arith.constant 0.000000e+00 : f32
    %123 = vector.broadcast %cst_39 : f32 to vector<8x16xf32>
    %124 = arith.maximumf %122, %123 : vector<8x16xf32>
    %c0_40 = arith.constant 0 : index
    %c0_41 = arith.constant 0 : index
    %125 = vector.load %arg11[%c0_40, %c0_41] : memref<16x16xf32, #tpu.memory_space<vmem>>, vector<16x16xf32>
    %cst_42 = arith.constant dense<0.000000e+00> : vector<8x16xf32>
    %126 = tpu.matmul %124, %125, %cst_42 {dimension_numbers = #tpu.dot_dimension_numbers<[1], [0], [0], [1], [0, 0, 1, 1], [], []>} : vector<8x16xf32>, vector<16x16xf32>, vector<8x16xf32> -> vector<8x16xf32>
    %c0_43 = arith.constant 0 : index
    %c0_44 = arith.constant 0 : index
    %127 = vector.load %arg12[%c0_43, %c0_44] : memref<1x16xf32, #tpu.memory_space<vmem>>, vector<1x16xf32>
    %128 = vector.broadcast %127 : vector<1x16xf32> to vector<8x16xf32>
    %129 = arith.addf %126, %128 : vector<8x16xf32>
    %cst_45 = arith.constant 0.000000e+00 : f32
    %130 = vector.broadcast %cst_45 : f32 to vector<8x16xf32>
    %131 = arith.maximumf %129, %130 : vector<8x16xf32>
    %c0_46 = arith.constant 0 : index
    %c0_47 = arith.constant 0 : index
    %132 = vector.load %arg13[%c0_46, %c0_47] : memref<16x16xf32, #tpu.memory_space<vmem>>, vector<16x16xf32>
    %cst_48 = arith.constant dense<0.000000e+00> : vector<8x16xf32>
    %133 = tpu.matmul %131, %132, %cst_48 {dimension_numbers = #tpu.dot_dimension_numbers<[1], [0], [0], [1], [0, 0, 1, 1], [], []>} : vector<8x16xf32>, vector<16x16xf32>, vector<8x16xf32> -> vector<8x16xf32>
    %c0_49 = arith.constant 0 : index
    %c0_50 = arith.constant 0 : index
    %134 = vector.load %arg14[%c0_49, %c0_50] : memref<1x16xf32, #tpu.memory_space<vmem>>, vector<1x16xf32>
    %135 = vector.broadcast %134 : vector<1x16xf32> to vector<8x16xf32>
    %136 = arith.addf %133, %135 : vector<8x16xf32>
    %cst_51 = arith.constant 0.000000e+00 : f32
    %137 = vector.broadcast %cst_51 : f32 to vector<8x8xf32>
    %138 = vector.extract_strided_slice %136 {offsets = [0, 0], sizes = [8, 1], strides = [1, 1]} : vector<8x16xf32> to vector<8x1xf32>
    %139 = vector.broadcast %138 : vector<8x1xf32> to vector<8x2xf32>
    %140 = arith.mulf %139, %31 : vector<8x2xf32>
    %c0_52 = arith.constant 0 : index
    %c0_53 = arith.constant 0 : index
    %c0_54 = arith.constant 0 : index
    %c0_55 = arith.constant 0 : index
    %141 = vector.load %arg4[%c0_52, %c0_53, %c0_54, %c0_55] : memref<1x4x8x4xf32, #tpu.memory_space<vmem>>, vector<1x1x8x4xf32>
    %142 = vector.shape_cast %141 : vector<1x1x8x4xf32> to vector<8x4xf32>
    %143 = vector.broadcast %138 : vector<8x1xf32> to vector<8x4xf32>
    %144 = arith.mulf %143, %142 : vector<8x4xf32>
    %145 = vector.extract_strided_slice %136 {offsets = [0, 1], sizes = [8, 1], strides = [1, 1]} : vector<8x16xf32> to vector<8x1xf32>
    %146 = vector.broadcast %145 : vector<8x1xf32> to vector<8x2xf32>
    %147 = arith.mulf %146, %59 : vector<8x2xf32>
    %148 = arith.addf %140, %147 : vector<8x2xf32>
    %c0_56 = arith.constant 0 : index
    %c1_57 = arith.constant 1 : index
    %c0_58 = arith.constant 0 : index
    %c0_59 = arith.constant 0 : index
    %149 = vector.load %arg4[%c0_56, %c1_57, %c0_58, %c0_59] : memref<1x4x8x4xf32, #tpu.memory_space<vmem>>, vector<1x1x8x4xf32>
    %150 = vector.shape_cast %149 : vector<1x1x8x4xf32> to vector<8x4xf32>
    %151 = vector.broadcast %145 : vector<8x1xf32> to vector<8x4xf32>
    %152 = arith.mulf %151, %150 : vector<8x4xf32>
    %153 = arith.addf %144, %152 : vector<8x4xf32>
    %154 = vector.extract_strided_slice %136 {offsets = [0, 2], sizes = [8, 1], strides = [1, 1]} : vector<8x16xf32> to vector<8x1xf32>
    %155 = vector.broadcast %154 : vector<8x1xf32> to vector<8x2xf32>
    %156 = arith.mulf %155, %87 : vector<8x2xf32>
    %157 = arith.addf %148, %156 : vector<8x2xf32>
    %c0_60 = arith.constant 0 : index
    %c2_61 = arith.constant 2 : index
    %c0_62 = arith.constant 0 : index
    %c0_63 = arith.constant 0 : index
    %158 = vector.load %arg4[%c0_60, %c2_61, %c0_62, %c0_63] : memref<1x4x8x4xf32, #tpu.memory_space<vmem>>, vector<1x1x8x4xf32>
    %159 = vector.shape_cast %158 : vector<1x1x8x4xf32> to vector<8x4xf32>
    %160 = vector.broadcast %154 : vector<8x1xf32> to vector<8x4xf32>
    %161 = arith.mulf %160, %159 : vector<8x4xf32>
    %162 = arith.addf %153, %161 : vector<8x4xf32>
    %163 = vector.extract_strided_slice %136 {offsets = [0, 3], sizes = [8, 1], strides = [1, 1]} : vector<8x16xf32> to vector<8x1xf32>
    %164 = vector.broadcast %163 : vector<8x1xf32> to vector<8x2xf32>
    %165 = arith.mulf %164, %115 : vector<8x2xf32>
    %166 = arith.addf %157, %165 : vector<8x2xf32>
    %c0_64 = arith.constant 0 : index
    %c3_65 = arith.constant 3 : index
    %c0_66 = arith.constant 0 : index
    %c0_67 = arith.constant 0 : index
    %167 = vector.load %arg4[%c0_64, %c3_65, %c0_66, %c0_67] : memref<1x4x8x4xf32, #tpu.memory_space<vmem>>, vector<1x1x8x4xf32>
    %168 = vector.shape_cast %167 : vector<1x1x8x4xf32> to vector<8x4xf32>
    %169 = vector.broadcast %163 : vector<8x1xf32> to vector<8x4xf32>
    %170 = arith.mulf %169, %168 : vector<8x4xf32>
    %171 = arith.addf %162, %170 : vector<8x4xf32>
    %c0_68 = arith.constant 0 : index
    %c0_69 = arith.constant 0 : index
    %c0_70 = arith.constant 0 : index
    %172 = vector.load %arg15[%c0_68, %c0_69, %c0_70] : memref<4x2x8xf32, #tpu.memory_space<vmem>>, vector<1x2x8xf32>
    %173 = vector.shape_cast %172 : vector<1x2x8xf32> to vector<2x8xf32>
    %cst_71 = arith.constant dense<0.000000e+00> : vector<8x8xf32>
    %174 = tpu.matmul %166, %173, %cst_71 {dimension_numbers = #tpu.dot_dimension_numbers<[1], [0], [0], [1], [0, 0, 1, 1], [], []>} : vector<8x2xf32>, vector<2x8xf32>, vector<8x8xf32> -> vector<8x8xf32>
    %175 = arith.addf %137, %174 : vector<8x8xf32>
    %c0_72 = arith.constant 0 : index
    %c0_73 = arith.constant 0 : index
    %c0_74 = arith.constant 0 : index
    %176 = vector.load %arg16[%c0_72, %c0_73, %c0_74] : memref<4x4x8xf32, #tpu.memory_space<vmem>>, vector<1x4x8xf32>
    %177 = vector.shape_cast %176 : vector<1x4x8xf32> to vector<4x8xf32>
    %cst_75 = arith.constant dense<0.000000e+00> : vector<8x8xf32>
    %178 = tpu.matmul %171, %177, %cst_75 {dimension_numbers = #tpu.dot_dimension_numbers<[1], [0], [0], [1], [0, 0, 1, 1], [], []>} : vector<8x4xf32>, vector<4x8xf32>, vector<8x8xf32> -> vector<8x8xf32>
    %179 = arith.addf %175, %178 : vector<8x8xf32>
    %180 = vector.extract_strided_slice %136 {offsets = [0, 4], sizes = [8, 1], strides = [1, 1]} : vector<8x16xf32> to vector<8x1xf32>
    %181 = vector.broadcast %180 : vector<8x1xf32> to vector<8x2xf32>
    %182 = arith.mulf %181, %31 : vector<8x2xf32>
    %c0_76 = arith.constant 0 : index
    %c0_77 = arith.constant 0 : index
    %c0_78 = arith.constant 0 : index
    %c0_79 = arith.constant 0 : index
    %183 = vector.load %arg4[%c0_76, %c0_77, %c0_78, %c0_79] : memref<1x4x8x4xf32, #tpu.memory_space<vmem>>, vector<1x1x8x4xf32>
    %184 = vector.shape_cast %183 : vector<1x1x8x4xf32> to vector<8x4xf32>
    %185 = vector.broadcast %180 : vector<8x1xf32> to vector<8x4xf32>
    %186 = arith.mulf %185, %184 : vector<8x4xf32>
    %187 = vector.extract_strided_slice %136 {offsets = [0, 5], sizes = [8, 1], strides = [1, 1]} : vector<8x16xf32> to vector<8x1xf32>
    %188 = vector.broadcast %187 : vector<8x1xf32> to vector<8x2xf32>
    %189 = arith.mulf %188, %59 : vector<8x2xf32>
    %190 = arith.addf %182, %189 : vector<8x2xf32>
    %c0_80 = arith.constant 0 : index
    %c1_81 = arith.constant 1 : index
    %c0_82 = arith.constant 0 : index
    %c0_83 = arith.constant 0 : index
    %191 = vector.load %arg4[%c0_80, %c1_81, %c0_82, %c0_83] : memref<1x4x8x4xf32, #tpu.memory_space<vmem>>, vector<1x1x8x4xf32>
    %192 = vector.shape_cast %191 : vector<1x1x8x4xf32> to vector<8x4xf32>
    %193 = vector.broadcast %187 : vector<8x1xf32> to vector<8x4xf32>
    %194 = arith.mulf %193, %192 : vector<8x4xf32>
    %195 = arith.addf %186, %194 : vector<8x4xf32>
    %196 = vector.extract_strided_slice %136 {offsets = [0, 6], sizes = [8, 1], strides = [1, 1]} : vector<8x16xf32> to vector<8x1xf32>
    %197 = vector.broadcast %196 : vector<8x1xf32> to vector<8x2xf32>
    %198 = arith.mulf %197, %87 : vector<8x2xf32>
    %199 = arith.addf %190, %198 : vector<8x2xf32>
    %c0_84 = arith.constant 0 : index
    %c2_85 = arith.constant 2 : index
    %c0_86 = arith.constant 0 : index
    %c0_87 = arith.constant 0 : index
    %200 = vector.load %arg4[%c0_84, %c2_85, %c0_86, %c0_87] : memref<1x4x8x4xf32, #tpu.memory_space<vmem>>, vector<1x1x8x4xf32>
    %201 = vector.shape_cast %200 : vector<1x1x8x4xf32> to vector<8x4xf32>
    %202 = vector.broadcast %196 : vector<8x1xf32> to vector<8x4xf32>
    %203 = arith.mulf %202, %201 : vector<8x4xf32>
    %204 = arith.addf %195, %203 : vector<8x4xf32>
    %205 = vector.extract_strided_slice %136 {offsets = [0, 7], sizes = [8, 1], strides = [1, 1]} : vector<8x16xf32> to vector<8x1xf32>
    %206 = vector.broadcast %205 : vector<8x1xf32> to vector<8x2xf32>
    %207 = arith.mulf %206, %115 : vector<8x2xf32>
    %208 = arith.addf %199, %207 : vector<8x2xf32>
    %c0_88 = arith.constant 0 : index
    %c3_89 = arith.constant 3 : index
    %c0_90 = arith.constant 0 : index
    %c0_91 = arith.constant 0 : index
    %209 = vector.load %arg4[%c0_88, %c3_89, %c0_90, %c0_91] : memref<1x4x8x4xf32, #tpu.memory_space<vmem>>, vector<1x1x8x4xf32>
    %210 = vector.shape_cast %209 : vector<1x1x8x4xf32> to vector<8x4xf32>
    %211 = vector.broadcast %205 : vector<8x1xf32> to vector<8x4xf32>
    %212 = arith.mulf %211, %210 : vector<8x4xf32>
    %213 = arith.addf %204, %212 : vector<8x4xf32>
    %c1_92 = arith.constant 1 : index
    %c0_93 = arith.constant 0 : index
    %c0_94 = arith.constant 0 : index
    %214 = vector.load %arg15[%c1_92, %c0_93, %c0_94] : memref<4x2x8xf32, #tpu.memory_space<vmem>>, vector<1x2x8xf32>
    %215 = vector.shape_cast %214 : vector<1x2x8xf32> to vector<2x8xf32>
    %cst_95 = arith.constant dense<0.000000e+00> : vector<8x8xf32>
    %216 = tpu.matmul %208, %215, %cst_95 {dimension_numbers = #tpu.dot_dimension_numbers<[1], [0], [0], [1], [0, 0, 1, 1], [], []>} : vector<8x2xf32>, vector<2x8xf32>, vector<8x8xf32> -> vector<8x8xf32>
    %217 = arith.addf %179, %216 : vector<8x8xf32>
    %c1_96 = arith.constant 1 : index
    %c0_97 = arith.constant 0 : index
    %c0_98 = arith.constant 0 : index
    %218 = vector.load %arg16[%c1_96, %c0_97, %c0_98] : memref<4x4x8xf32, #tpu.memory_space<vmem>>, vector<1x4x8xf32>
    %219 = vector.shape_cast %218 : vector<1x4x8xf32> to vector<4x8xf32>
    %cst_99 = arith.constant dense<0.000000e+00> : vector<8x8xf32>
    %220 = tpu.matmul %213, %219, %cst_99 {dimension_numbers = #tpu.dot_dimension_numbers<[1], [0], [0], [1], [0, 0, 1, 1], [], []>} : vector<8x4xf32>, vector<4x8xf32>, vector<8x8xf32> -> vector<8x8xf32>
    %221 = arith.addf %217, %220 : vector<8x8xf32>
    %222 = vector.extract_strided_slice %136 {offsets = [0, 8], sizes = [8, 1], strides = [1, 1]} : vector<8x16xf32> to vector<8x1xf32>
    %223 = vector.broadcast %222 : vector<8x1xf32> to vector<8x2xf32>
    %224 = arith.mulf %223, %31 : vector<8x2xf32>
    %c0_100 = arith.constant 0 : index
    %c0_101 = arith.constant 0 : index
    %c0_102 = arith.constant 0 : index
    %c0_103 = arith.constant 0 : index
    %225 = vector.load %arg4[%c0_100, %c0_101, %c0_102, %c0_103] : memref<1x4x8x4xf32, #tpu.memory_space<vmem>>, vector<1x1x8x4xf32>
    %226 = vector.shape_cast %225 : vector<1x1x8x4xf32> to vector<8x4xf32>
    %227 = vector.broadcast %222 : vector<8x1xf32> to vector<8x4xf32>
    %228 = arith.mulf %227, %226 : vector<8x4xf32>
    %229 = vector.extract_strided_slice %136 {offsets = [0, 9], sizes = [8, 1], strides = [1, 1]} : vector<8x16xf32> to vector<8x1xf32>
    %230 = vector.broadcast %229 : vector<8x1xf32> to vector<8x2xf32>
    %231 = arith.mulf %230, %59 : vector<8x2xf32>
    %232 = arith.addf %224, %231 : vector<8x2xf32>
    %c0_104 = arith.constant 0 : index
    %c1_105 = arith.constant 1 : index
    %c0_106 = arith.constant 0 : index
    %c0_107 = arith.constant 0 : index
    %233 = vector.load %arg4[%c0_104, %c1_105, %c0_106, %c0_107] : memref<1x4x8x4xf32, #tpu.memory_space<vmem>>, vector<1x1x8x4xf32>
    %234 = vector.shape_cast %233 : vector<1x1x8x4xf32> to vector<8x4xf32>
    %235 = vector.broadcast %229 : vector<8x1xf32> to vector<8x4xf32>
    %236 = arith.mulf %235, %234 : vector<8x4xf32>
    %237 = arith.addf %228, %236 : vector<8x4xf32>
    %238 = vector.extract_strided_slice %136 {offsets = [0, 10], sizes = [8, 1], strides = [1, 1]} : vector<8x16xf32> to vector<8x1xf32>
    %239 = vector.broadcast %238 : vector<8x1xf32> to vector<8x2xf32>
    %240 = arith.mulf %239, %87 : vector<8x2xf32>
    %241 = arith.addf %232, %240 : vector<8x2xf32>
    %c0_108 = arith.constant 0 : index
    %c2_109 = arith.constant 2 : index
    %c0_110 = arith.constant 0 : index
    %c0_111 = arith.constant 0 : index
    %242 = vector.load %arg4[%c0_108, %c2_109, %c0_110, %c0_111] : memref<1x4x8x4xf32, #tpu.memory_space<vmem>>, vector<1x1x8x4xf32>
    %243 = vector.shape_cast %242 : vector<1x1x8x4xf32> to vector<8x4xf32>
    %244 = vector.broadcast %238 : vector<8x1xf32> to vector<8x4xf32>
    %245 = arith.mulf %244, %243 : vector<8x4xf32>
    %246 = arith.addf %237, %245 : vector<8x4xf32>
    %247 = vector.extract_strided_slice %136 {offsets = [0, 11], sizes = [8, 1], strides = [1, 1]} : vector<8x16xf32> to vector<8x1xf32>
    %248 = vector.broadcast %247 : vector<8x1xf32> to vector<8x2xf32>
    %249 = arith.mulf %248, %115 : vector<8x2xf32>
    %250 = arith.addf %241, %249 : vector<8x2xf32>
    %c0_112 = arith.constant 0 : index
    %c3_113 = arith.constant 3 : index
    %c0_114 = arith.constant 0 : index
    %c0_115 = arith.constant 0 : index
    %251 = vector.load %arg4[%c0_112, %c3_113, %c0_114, %c0_115] : memref<1x4x8x4xf32, #tpu.memory_space<vmem>>, vector<1x1x8x4xf32>
    %252 = vector.shape_cast %251 : vector<1x1x8x4xf32> to vector<8x4xf32>
    %253 = vector.broadcast %247 : vector<8x1xf32> to vector<8x4xf32>
    %254 = arith.mulf %253, %252 : vector<8x4xf32>
    %255 = arith.addf %246, %254 : vector<8x4xf32>
    %c2_116 = arith.constant 2 : index
    %c0_117 = arith.constant 0 : index
    %c0_118 = arith.constant 0 : index
    %256 = vector.load %arg15[%c2_116, %c0_117, %c0_118] : memref<4x2x8xf32, #tpu.memory_space<vmem>>, vector<1x2x8xf32>
    %257 = vector.shape_cast %256 : vector<1x2x8xf32> to vector<2x8xf32>
    %cst_119 = arith.constant dense<0.000000e+00> : vector<8x8xf32>
    %258 = tpu.matmul %250, %257, %cst_119 {dimension_numbers = #tpu.dot_dimension_numbers<[1], [0], [0], [1], [0, 0, 1, 1], [], []>} : vector<8x2xf32>, vector<2x8xf32>, vector<8x8xf32> -> vector<8x8xf32>
    %259 = arith.addf %221, %258 : vector<8x8xf32>
    %c2_120 = arith.constant 2 : index
    %c0_121 = arith.constant 0 : index
    %c0_122 = arith.constant 0 : index
    %260 = vector.load %arg16[%c2_120, %c0_121, %c0_122] : memref<4x4x8xf32, #tpu.memory_space<vmem>>, vector<1x4x8xf32>
    %261 = vector.shape_cast %260 : vector<1x4x8xf32> to vector<4x8xf32>
    %cst_123 = arith.constant dense<0.000000e+00> : vector<8x8xf32>
    %262 = tpu.matmul %255, %261, %cst_123 {dimension_numbers = #tpu.dot_dimension_numbers<[1], [0], [0], [1], [0, 0, 1, 1], [], []>} : vector<8x4xf32>, vector<4x8xf32>, vector<8x8xf32> -> vector<8x8xf32>
    %263 = arith.addf %259, %262 : vector<8x8xf32>
    %264 = vector.extract_strided_slice %136 {offsets = [0, 12], sizes = [8, 1], strides = [1, 1]} : vector<8x16xf32> to vector<8x1xf32>
    %265 = vector.broadcast %264 : vector<8x1xf32> to vector<8x2xf32>
    %266 = arith.mulf %265, %31 : vector<8x2xf32>
    %c0_124 = arith.constant 0 : index
    %c0_125 = arith.constant 0 : index
    %c0_126 = arith.constant 0 : index
    %c0_127 = arith.constant 0 : index
    %267 = vector.load %arg4[%c0_124, %c0_125, %c0_126, %c0_127] : memref<1x4x8x4xf32, #tpu.memory_space<vmem>>, vector<1x1x8x4xf32>
    %268 = vector.shape_cast %267 : vector<1x1x8x4xf32> to vector<8x4xf32>
    %269 = vector.broadcast %264 : vector<8x1xf32> to vector<8x4xf32>
    %270 = arith.mulf %269, %268 : vector<8x4xf32>
    %271 = vector.extract_strided_slice %136 {offsets = [0, 13], sizes = [8, 1], strides = [1, 1]} : vector<8x16xf32> to vector<8x1xf32>
    %272 = vector.broadcast %271 : vector<8x1xf32> to vector<8x2xf32>
    %273 = arith.mulf %272, %59 : vector<8x2xf32>
    %274 = arith.addf %266, %273 : vector<8x2xf32>
    %c0_128 = arith.constant 0 : index
    %c1_129 = arith.constant 1 : index
    %c0_130 = arith.constant 0 : index
    %c0_131 = arith.constant 0 : index
    %275 = vector.load %arg4[%c0_128, %c1_129, %c0_130, %c0_131] : memref<1x4x8x4xf32, #tpu.memory_space<vmem>>, vector<1x1x8x4xf32>
    %276 = vector.shape_cast %275 : vector<1x1x8x4xf32> to vector<8x4xf32>
    %277 = vector.broadcast %271 : vector<8x1xf32> to vector<8x4xf32>
    %278 = arith.mulf %277, %276 : vector<8x4xf32>
    %279 = arith.addf %270, %278 : vector<8x4xf32>
    %280 = vector.extract_strided_slice %136 {offsets = [0, 14], sizes = [8, 1], strides = [1, 1]} : vector<8x16xf32> to vector<8x1xf32>
    %281 = vector.broadcast %280 : vector<8x1xf32> to vector<8x2xf32>
    %282 = arith.mulf %281, %87 : vector<8x2xf32>
    %283 = arith.addf %274, %282 : vector<8x2xf32>
    %c0_132 = arith.constant 0 : index
    %c2_133 = arith.constant 2 : index
    %c0_134 = arith.constant 0 : index
    %c0_135 = arith.constant 0 : index
    %284 = vector.load %arg4[%c0_132, %c2_133, %c0_134, %c0_135] : memref<1x4x8x4xf32, #tpu.memory_space<vmem>>, vector<1x1x8x4xf32>
    %285 = vector.shape_cast %284 : vector<1x1x8x4xf32> to vector<8x4xf32>
    %286 = vector.broadcast %280 : vector<8x1xf32> to vector<8x4xf32>
    %287 = arith.mulf %286, %285 : vector<8x4xf32>
    %288 = arith.addf %279, %287 : vector<8x4xf32>
    %289 = vector.extract_strided_slice %136 {offsets = [0, 15], sizes = [8, 1], strides = [1, 1]} : vector<8x16xf32> to vector<8x1xf32>
    %290 = vector.broadcast %289 : vector<8x1xf32> to vector<8x2xf32>
    %291 = arith.mulf %290, %115 : vector<8x2xf32>
    %292 = arith.addf %283, %291 : vector<8x2xf32>
    %c0_136 = arith.constant 0 : index
    %c3_137 = arith.constant 3 : index
    %c0_138 = arith.constant 0 : index
    %c0_139 = arith.constant 0 : index
    %293 = vector.load %arg4[%c0_136, %c3_137, %c0_138, %c0_139] : memref<1x4x8x4xf32, #tpu.memory_space<vmem>>, vector<1x1x8x4xf32>
    %294 = vector.shape_cast %293 : vector<1x1x8x4xf32> to vector<8x4xf32>
    %295 = vector.broadcast %289 : vector<8x1xf32> to vector<8x4xf32>
    %296 = arith.mulf %295, %294 : vector<8x4xf32>
    %297 = arith.addf %288, %296 : vector<8x4xf32>
    %c3_140 = arith.constant 3 : index
    %c0_141 = arith.constant 0 : index
    %c0_142 = arith.constant 0 : index
    %298 = vector.load %arg15[%c3_140, %c0_141, %c0_142] : memref<4x2x8xf32, #tpu.memory_space<vmem>>, vector<1x2x8xf32>
    %299 = vector.shape_cast %298 : vector<1x2x8xf32> to vector<2x8xf32>
    %cst_143 = arith.constant dense<0.000000e+00> : vector<8x8xf32>
    %300 = tpu.matmul %292, %299, %cst_143 {dimension_numbers = #tpu.dot_dimension_numbers<[1], [0], [0], [1], [0, 0, 1, 1], [], []>} : vector<8x2xf32>, vector<2x8xf32>, vector<8x8xf32> -> vector<8x8xf32>
    %301 = arith.addf %263, %300 : vector<8x8xf32>
    %c3_144 = arith.constant 3 : index
    %c0_145 = arith.constant 0 : index
    %c0_146 = arith.constant 0 : index
    %302 = vector.load %arg16[%c3_144, %c0_145, %c0_146] : memref<4x4x8xf32, #tpu.memory_space<vmem>>, vector<1x4x8xf32>
    %303 = vector.shape_cast %302 : vector<1x4x8xf32> to vector<4x8xf32>
    %cst_147 = arith.constant dense<0.000000e+00> : vector<8x8xf32>
    %304 = tpu.matmul %297, %303, %cst_147 {dimension_numbers = #tpu.dot_dimension_numbers<[1], [0], [0], [1], [0, 0, 1, 1], [], []>} : vector<8x4xf32>, vector<4x8xf32>, vector<8x8xf32> -> vector<8x8xf32>
    %305 = arith.addf %301, %304 : vector<8x8xf32>
    %c0_148 = arith.constant 0 : index
    %c0_149 = arith.constant 0 : index
    %306 = vector.load %arg17[%c0_148, %c0_149] : memref<1x8xf32, #tpu.memory_space<vmem>>, vector<1x8xf32>
    %307 = vector.broadcast %306 : vector<1x8xf32> to vector<8x8xf32>
    %308 = arith.addf %305, %307 : vector<8x8xf32>
    %cst_150 = arith.constant 0.000000e+00 : f32
    %309 = vector.broadcast %cst_150 : f32 to vector<8x8xf32>
    %310 = arith.maximumf %308, %309 : vector<8x8xf32>
    %c0_151 = arith.constant 0 : index
    %c0_152 = arith.constant 0 : index
    %c0_153 = arith.constant 0 : index
    %311 = vector.load %arg18[%c0_151, %c0_152, %c0_153] : memref<1x8x8xf32, #tpu.memory_space<vmem>>, vector<1x8x8xf32>
    %312 = vector.shape_cast %311 : vector<1x8x8xf32> to vector<8x8xf32>
    %313 = vector.shape_cast %310 : vector<8x8xf32> to vector<1x8x8xf32>
    tpu.vector_store %arg18[%c0_151, %c0_152, %c0_153], %313 {strides = array<i32>} : memref<1x8x8xf32, #tpu.memory_space<vmem>>, vector<1x8x8xf32>,
    return
  }
  func.func @transform_0(%arg0: i32, %arg1: i32) -> (i32, i32, i32, i32) {
    %c0_i32 = arith.constant 0 : i32
    %c0_i32_0 = arith.constant 0 : i32
    %c0_i32_1 = arith.constant 0 : i32
    return %arg0, %c0_i32, %arg1, %c0_i32_0 : i32, i32, i32, i32
  }
  func.func @transform_1(%arg0: i32, %arg1: i32) -> (i32, i32, i32) {
    %c0_i32 = arith.constant 0 : i32
    %c0_i32_0 = arith.constant 0 : i32
    return %arg0, %arg1, %c0_i32 : i32, i32, i32
  }
  func.func @transform_2(%arg0: i32, %arg1: i32) -> (i32, i32, i32, i32) {
    %c0_i32 = arith.constant 0 : i32
    %c0_i32_0 = arith.constant 0 : i32
    %c0_i32_1 = arith.constant 0 : i32
    return %arg0, %c0_i32, %arg1, %c0_i32_0 : i32, i32, i32, i32
  }
  func.func @transform_3(%arg0: i32, %arg1: i32) -> (i32, i32) {
    %c0_i32 = arith.constant 0 : i32
    %c0_i32_0 = arith.constant 0 : i32
    %c0_i32_1 = arith.constant 0 : i32
    return %c0_i32, %c0_i32_0 : i32, i32
  }
  func.func @transform_4(%arg0: i32, %arg1: i32) -> (i32, i32) {
    %c0_i32 = arith.constant 0 : i32
    %c0_i32_0 = arith.constant 0 : i32
    %c0_i32_1 = arith.constant 0 : i32
    return %c0_i32, %c0_i32_0 : i32, i32
  }
  func.func @transform_5(%arg0: i32, %arg1: i32) -> (i32, i32) {
    %c0_i32 = arith.constant 0 : i32
    %c0_i32_0 = arith.constant 0 : i32
    %c0_i32_1 = arith.constant 0 : i32
    return %c0_i32, %c0_i32_0 : i32, i32
  }
  func.func @transform_6(%arg0: i32, %arg1: i32) -> (i32, i32) {
    %c0_i32 = arith.constant 0 : i32
    %c0_i32_0 = arith.constant 0 : i32
    %c0_i32_1 = arith.constant 0 : i32
    return %c0_i32, %c0_i32_0 : i32, i32
  }
  func.func @transform_7(%arg0: i32, %arg1: i32) -> (i32, i32) {
    %c0_i32 = arith.constant 0 : i32
    %c0_i32_0 = arith.constant 0 : i32
    %c0_i32_1 = arith.constant 0 : i32
    return %c0_i32, %c0_i32_0 : i32, i32
  }
  func.func @transform_8(%arg0: i32, %arg1: i32) -> (i32, i32) {
    %c0_i32 = arith.constant 0 : i32
    %c0_i32_0 = arith.constant 0 : i32
    %c0_i32_1 = arith.constant 0 : i32
    return %c0_i32, %c0_i32_0 : i32, i32
  }
  func.func @transform_9(%arg0: i32, %arg1: i32) -> (i32, i32) {
    %c0_i32 = arith.constant 0 : i32
    %c0_i32_0 = arith.constant 0 : i32
    %c0_i32_1 = arith.constant 0 : i32
    return %c0_i32, %c0_i32_0 : i32, i32
  }
  func.func @transform_10(%arg0: i32, %arg1: i32) -> (i32, i32) {
    %c0_i32 = arith.constant 0 : i32
    %c0_i32_0 = arith.constant 0 : i32
    %c0_i32_1 = arith.constant 0 : i32
    return %c0_i32, %c0_i32_0 : i32, i32
  }
  func.func @transform_11(%arg0: i32, %arg1: i32) -> (i32, i32) {
    %c0_i32 = arith.constant 0 : i32
    %c0_i32_0 = arith.constant 0 : i32
    %c0_i32_1 = arith.constant 0 : i32
    return %c0_i32, %c0_i32_0 : i32, i32
  }
  func.func @transform_12(%arg0: i32, %arg1: i32) -> (i32, i32) {
    %c0_i32 = arith.constant 0 : i32
    %c0_i32_0 = arith.constant 0 : i32
    %c0_i32_1 = arith.constant 0 : i32
    return %c0_i32, %c0_i32_0 : i32, i32
  }
  func.func @transform_13(%arg0: i32, %arg1: i32) -> (i32, i32, i32) {
    %c0_i32 = arith.constant 0 : i32
    %c0_i32_0 = arith.constant 0 : i32
    %c0_i32_1 = arith.constant 0 : i32
    %c0_i32_2 = arith.constant 0 : i32
    return %c0_i32, %c0_i32_0, %c0_i32_1 : i32, i32, i32
  }
  func.func @transform_14(%arg0: i32, %arg1: i32) -> (i32, i32, i32) {
    %c0_i32 = arith.constant 0 : i32
    %c0_i32_0 = arith.constant 0 : i32
    %c0_i32_1 = arith.constant 0 : i32
    %c0_i32_2 = arith.constant 0 : i32
    return %c0_i32, %c0_i32_0, %c0_i32_1 : i32, i32, i32
  }
  func.func @transform_15(%arg0: i32, %arg1: i32) -> (i32, i32) {
    %c0_i32 = arith.constant 0 : i32
    %c0_i32_0 = arith.constant 0 : i32
    %c0_i32_1 = arith.constant 0 : i32
    return %c0_i32, %c0_i32_0 : i32, i32
  }
  func.func @transform_16(%arg0: i32, %arg1: i32) -> (i32, i32, i32) {
    %c0_i32 = arith.constant 0 : i32
    %c0_i32_0 = arith.constant 0 : i32
    return %arg0, %arg1, %c0_i32 : i32, i32, i32
  }
}

</mosaic_0001>

<llo_original>
// kernel: tpu_custom_call.1
$region0: #{tpu_custom_call.1}
  #allocation0 [shape = 'u32[]', space=smem, size = 0x4, offset = 0x4, fixed_abs, tag = 'smem constant byte address 0x4 - core index']
  #allocation1 [shape = 'u32[72,128]{1,0:T(1,128)}', space=vmem, size = 0x9000, scoped, tag = 'internal scratch']
  %s0 = inlined_call_operand.vmem [shape: f32[2,4,8,3], index: 0, kind: input, shape index: {}]
  %s1 = inlined_call_operand.vmem [shape: f32[2,8,12], index: 1, kind: input, shape index: {}]
  %s2 = inlined_call_operand.vmem [shape: f32[2,4,8,4], index: 2, kind: input, shape index: {}]
  %s3 = inlined_call_operand.vmem [shape: f32[3,2], index: 3, kind: input, shape index: {}]
  %s4 = inlined_call_operand.vmem [shape: f32[1,2], index: 4, kind: input, shape index: {}]
  %s5 = inlined_call_operand.vmem [shape: f32[2,2], index: 5, kind: input, shape index: {}]
  %s6 = inlined_call_operand.vmem [shape: f32[1,2], index: 6, kind: input, shape index: {}]
  %s7 = inlined_call_operand.vmem [shape: f32[12,16], index: 7, kind: input, shape index: {}]
  %s8 = inlined_call_operand.vmem [shape: f32[1,16], index: 8, kind: input, shape index: {}]
  %s9 = inlined_call_operand.vmem [shape: f32[16,16], index: 9, kind: input, shape index: {}]
  %s10 = inlined_call_operand.vmem [shape: f32[1,16], index: 10, kind: input, shape index: {}]
  %s11 = inlined_call_operand.vmem [shape: f32[16,16], index: 11, kind: input, shape index: {}]
  %s12 = inlined_call_operand.vmem [shape: f32[1,16], index: 12, kind: input, shape index: {}]
  %s13 = inlined_call_operand.vmem [shape: f32[4,2,8], index: 13, kind: input, shape index: {}]
  %s14 = inlined_call_operand.vmem [shape: f32[4,4,8], index: 14, kind: input, shape index: {}]
  %s15 = inlined_call_operand.vmem [shape: f32[1,8], index: 15, kind: input, shape index: {}]
  %s16 = inlined_call_operand.hbm [shape: f32[2,8,8], index: 16, kind: output, shape index: {}]
  %s17 = sld [smem:[#allocation0]]
  $region97: #{tpu_custom_call.1} parent=0
    _
  %s19 = ssub.s32 1, %s17
  %s20 = scalar_select 0, %s19, %s17
  $region1: #{tpu_custom_call.1} parent=0
    #allocation2 [shape = 'u8[8192]{0}', space=vmem, size = 0x2000, scoped, tag = 'output window, operand 0']
    #allocation3 [shape = 's32[2]{0}', space=sflag, size = 0x8, scoped, tag = 'scoped memory for tpu_custom_call.1']
    %21 = vsyncpa [#allocation3], 0
    %s22 = scalar_lea.sflag [#allocation3], 1
    %23 = vsyncpa %s22, 0
    loop: start=0, step=1, limit=4
    $region2: #{tpu_custom_call.1} parent=1 // loop_pre_header
      _
    $region3: #{tpu_custom_call.1} parent=1 // loop_header
      %s25 = sphi 0, %s29
      %p26 = scmp.ge.s32.totalorder %s25, 4
      %s32 = sphi 0, %s44
      %s33 = sphi 0, %s40
      %s34 = sphi 0, %s32
      %s35 = sphi 0, %s33
      %s36 = sphi 0, %s34
      %s37 = sphi 0, %s35
      %s49 = sphi 0, %s51
      %s52 = sphi 0, %s49
      %s53 = sphi 0, %s52
      %s69 = sphi 0, %s53
      %s77 = sphi 0, %s79
      %s80 = sphi 0, %s77
      %s81 = sphi 0, %s80
      %s97 = sphi 0, %s81
      %s105 = sphi 0, %s107
      %s108 = sphi 0, %s105
      %s109 = sphi 0, %s108
      %s125 = sphi 0, %s109
      %s129 = sphi 0, %s129
      %s131 = sphi 0, %s129
      %s132 = sphi 0, %s131
      %s146 = sphi 0, %s132
      %s150 = sphi 0, %s150
      %s152 = sphi 0, %s150
      %s153 = sphi 0, %s152
      %s167 = sphi 0, %s153
      %s171 = sphi 0, %s171
      %s173 = sphi 0, %s171
      %s174 = sphi 0, %s173
      %s188 = sphi 0, %s174
      %s192 = sphi 0, %s192
      %s194 = sphi 0, %s192
      %s195 = sphi 0, %s194
      %s209 = sphi 0, %s195
      %s213 = sphi 0, %s213
      %s215 = sphi 0, %s213
      %s216 = sphi 0, %s215
      %s230 = sphi 0, %s216
      %s234 = sphi 0, %s234
      %s236 = sphi 0, %s234
      %s237 = sphi 0, %s236
      %s251 = sphi 0, %s237
      %s255 = sphi 0, %s255
      %s257 = sphi 0, %s255
      %s258 = sphi 0, %s257
      %s272 = sphi 0, %s258
      %s276 = sphi 0, %s276
      %s278 = sphi 0, %s276
      %s279 = sphi 0, %s278
      %s293 = sphi 0, %s279
      %s297 = sphi 0, %s297
      %s299 = sphi 0, %s297
      %s300 = sphi 0, %s299
      %s314 = sphi 0, %s300
      %s318 = sphi 0, %s318
      %s320 = sphi 0, %s318
      %s321 = sphi 0, %s320
      %s335 = sphi 0, %s321
      %s339 = sphi 0, %s339
      %s341 = sphi 0, %s339
      %s342 = sphi 0, %s341
      %s356 = sphi 0, %s342
      %s360 = sphi 0, %s360
      %s362 = sphi 0, %s360
      %s363 = sphi 0, %s362
      %s377 = sphi 0, %s363
      %s381 = sphi 0, %s381
      %s383 = sphi 0, %s381
      %s384 = sphi 0, %s383
      %s398 = sphi 0, %s384
      %s406 = sphi 0, %s408
      %s409 = sphi 0, %s406
      %s410 = sphi 0, %s409
      %s426 = sphi 0, %s410
    $region4: #{tpu_custom_call.1} parent=1 // loop_header_branch
      %28 = sbr.rel (%p26) target = $region8
    $region5: #{tpu_custom_call.1} parent=1 // loop_body
      %s30 = ssub.s32 %s25, 1
      %s31 = ssub.s32 %s25, 2
      %s38 = sadd.s32 1, %s33
      %p39 = scmp.ge.s32.totalorder %s38, 1
      %s40 = scalar_select %p39, 0, %s38
      %s41 = sadd.s32 1, %s32
      %s42 = scalar_select %p39, %s41, %s32
      %p43 = scmp.ge.s32.totalorder %s42, 2
      %s44 = scalar_select %p43, 0, %s42
      %s45 = ssub.s32 %s32, %s44
      %s46 = ssub.s32 %s33, %s40
      %s47 = sor.u32 %s45, %s46
      %p48 = scmp.eq.s32.totalorder %s47, 0
      %s50 = sadd.s32 %s49, 1
      %s51 = scalar_select %p48, %s49, %s50
      %p54 = pneg %p48
      %p55 = scmp.eq.s32.totalorder %s25, 1
      %p56 = por %p54, %p55
      %p57 = scmp.ne.s32.totalorder %s49, %s52
      %p58 = scmp.eq.s32.totalorder %s25, 0
      %p59 = por %p57, %p58
      %p60 = scmp.ne.s32.totalorder %s49, %s52
      %p61 = scmp.eq.s32.totalorder %s30, 1
      %p62 = por %p60, %p61
      %p63 = scmp.ne.s32.totalorder %s52, %s53
      %p64 = scmp.eq.s32.totalorder %s30, 0
      %p65 = por %p63, %p64
      %p66 = scmp.ne.s32.totalorder %s52, %s53
      %p67 = scmp.eq.s32.totalorder %s31, 1
      %p68 = por %p66, %p67
      %p70 = scmp.ne.s32.totalorder %s53, %s69
      %p71 = scmp.eq.s32.totalorder %s31, 0
      %p72 = por %p70, %p71
      %s73 = ssub.s32 %s32, %s44
      %s74 = ssub.s32 %s33, %s40
      %s75 = sor.u32 %s73, %s74
      %p76 = scmp.eq.s32.totalorder %s75, 0
      %s78 = sadd.s32 %s77, 1
      %s79 = scalar_select %p76, %s77, %s78
      %p82 = pneg %p76
      %p83 = scmp.eq.s32.totalorder %s25, 1
      %p84 = por %p82, %p83
      %p85 = scmp.ne.s32.totalorder %s77, %s80
      %p86 = scmp.eq.s32.totalorder %s25, 0
      %p87 = por %p85, %p86
      %p88 = scmp.ne.s32.totalorder %s77, %s80
      %p89 = scmp.eq.s32.totalorder %s30, 1
      %p90 = por %p88, %p89
      %p91 = scmp.ne.s32.totalorder %s80, %s81
      %p92 = scmp.eq.s32.totalorder %s30, 0
      %p93 = por %p91, %p92
      %p94 = scmp.ne.s32.totalorder %s80, %s81
      %p95 = scmp.eq.s32.totalorder %s31, 1
      %p96 = por %p94, %p95
      %p98 = scmp.ne.s32.totalorder %s81, %s97
      %p99 = scmp.eq.s32.totalorder %s31, 0
      %p100 = por %p98, %p99
      %s101 = ssub.s32 %s32, %s44
      %s102 = ssub.s32 %s33, %s40
      %s103 = sor.u32 %s101, %s102
      %p104 = scmp.eq.s32.totalorder %s103, 0
      %s106 = sadd.s32 %s105, 1
      %s107 = scalar_select %p104, %s105, %s106
      %p110 = pneg %p104
      %p111 = scmp.eq.s32.totalorder %s25, 1
      %p112 = por %p110, %p111
      %p113 = scmp.ne.s32.totalorder %s105, %s108
      %p114 = scmp.eq.s32.totalorder %s25, 0
      %p115 = por %p113, %p114
      %p116 = scmp.ne.s32.totalorder %s105, %s108
      %p117 = scmp.eq.s32.totalorder %s30, 1
      %p118 = por %p116, %p117
      %p119 = scmp.ne.s32.totalorder %s108, %s109
      %p120 = scmp.eq.s32.totalorder %s30, 0
      %p121 = por %p119, %p120
      %p122 = scmp.ne.s32.totalorder %s108, %s109
      %p123 = scmp.eq.s32.totalorder %s31, 1
      %p124 = por %p122, %p123
      %p126 = scmp.ne.s32.totalorder %s109, %s125
      %p127 = scmp.eq.s32.totalorder %s31, 0
      %p128 = por %p126, %p127
      %s130 = sadd.s32 %s129, 1
      %p133 = scmp.eq.s32.totalorder %s25, 1
      %p134 = scmp.ne.s32.totalorder %s129, %s131
      %p135 = scmp.eq.s32.totalorder %s25, 0
      %p136 = por %p134, %p135
      %p137 = scmp.ne.s32.totalorder %s129, %s131
      %p138 = scmp.eq.s32.totalorder %s30, 1
      %p139 = por %p137, %p138
      %p140 = scmp.ne.s32.totalorder %s131, %s132
      %p141 = scmp.eq.s32.totalorder %s30, 0
      %p142 = por %p140, %p141
      %p143 = scmp.ne.s32.totalorder %s131, %s132
      %p144 = scmp.eq.s32.totalorder %s31, 1
      %p145 = por %p143, %p144
      %p147 = scmp.ne.s32.totalorder %s132, %s146
      %p148 = scmp.eq.s32.totalorder %s31, 0
      %p149 = por %p147, %p148
      %s151 = sadd.s32 %s150, 1
      %p154 = scmp.eq.s32.totalorder %s25, 1
      %p155 = scmp.ne.s32.totalorder %s150, %s152
      %p156 = scmp.eq.s32.totalorder %s25, 0
      %p157 = por %p155, %p156
      %p158 = scmp.ne.s32.totalorder %s150, %s152
      %p159 = scmp.eq.s32.totalorder %s30, 1
      %p160 = por %p158, %p159
      %p161 = scmp.ne.s32.totalorder %s152, %s153
      %p162 = scmp.eq.s32.totalorder %s30, 0
      %p163 = por %p161, %p162
      %p164 = scmp.ne.s32.totalorder %s152, %s153
      %p165 = scmp.eq.s32.totalorder %s31, 1
      %p166 = por %p164, %p165
      %p168 = scmp.ne.s32.totalorder %s153, %s167
      %p169 = scmp.eq.s32.totalorder %s31, 0
      %p170 = por %p168, %p169
      %s172 = sadd.s32 %s171, 1
      %p175 = scmp.eq.s32.totalorder %s25, 1
      %p176 = scmp.ne.s32.totalorder %s171, %s173
      %p177 = scmp.eq.s32.totalorder %s25, 0
      %p178 = por %p176, %p177
      %p179 = scmp.ne.s32.totalorder %s171, %s173
      %p180 = scmp.eq.s32.totalorder %s30, 1
      %p181 = por %p179, %p180
      %p182 = scmp.ne.s32.totalorder %s173, %s174
      %p183 = scmp.eq.s32.totalorder %s30, 0
      %p184 = por %p182, %p183
      %p185 = scmp.ne.s32.totalorder %s173, %s174
      %p186 = scmp.eq.s32.totalorder %s31, 1
      %p187 = por %p185, %p186
      %p189 = scmp.ne.s32.totalorder %s174, %s188
      %p190 = scmp.eq.s32.totalorder %s31, 0
      %p191 = por %p189, %p190
      %s193 = sadd.s32 %s192, 1
      %p196 = scmp.eq.s32.totalorder %s25, 1
      %p197 = scmp.ne.s32.totalorder %s192, %s194
      %p198 = scmp.eq.s32.totalorder %s25, 0
      %p199 = por %p197, %p198
      %p200 = scmp.ne.s32.totalorder %s192, %s194
      %p201 = scmp.eq.s32.totalorder %s30, 1
      %p202 = por %p200, %p201
      %p203 = scmp.ne.s32.totalorder %s194, %s195
      %p204 = scmp.eq.s32.totalorder %s30, 0
      %p205 = por %p203, %p204
      %p206 = scmp.ne.s32.totalorder %s194, %s195
      %p207 = scmp.eq.s32.totalorder %s31, 1
      %p208 = por %p206, %p207
      %p210 = scmp.ne.s32.totalorder %s195, %s209
      %p211 = scmp.eq.s32.totalorder %s31, 0
      %p212 = por %p210, %p211
      %s214 = sadd.s32 %s213, 1
      %p217 = scmp.eq.s32.totalorder %s25, 1
      %p218 = scmp.ne.s32.totalorder %s213, %s215
      %p219 = scmp.eq.s32.totalorder %s25, 0
      %p220 = por %p218, %p219
      %p221 = scmp.ne.s32.totalorder %s213, %s215
      %p222 = scmp.eq.s32.totalorder %s30, 1
      %p223 = por %p221, %p222
      %p224 = scmp.ne.s32.totalorder %s215, %s216
      %p225 = scmp.eq.s32.totalorder %s30, 0
      %p226 = por %p224, %p225
      %p227 = scmp.ne.s32.totalorder %s215, %s216
      %p228 = scmp.eq.s32.totalorder %s31, 1
      %p229 = por %p227, %p228
      %p231 = scmp.ne.s32.totalorder %s216, %s230
      %p232 = scmp.eq.s32.totalorder %s31, 0
      %p233 = por %p231, %p232
      %s235 = sadd.s32 %s234, 1
      %p238 = scmp.eq.s32.totalorder %s25, 1
      %p239 = scmp.ne.s32.totalorder %s234, %s236
      %p240 = scmp.eq.s32.totalorder %s25, 0
      %p241 = por %p239, %p240
      %p242 = scmp.ne.s32.totalorder %s234, %s236
      %p243 = scmp.eq.s32.totalorder %s30, 1
      %p244 = por %p242, %p243
      %p245 = scmp.ne.s32.totalorder %s236, %s237
      %p246 = scmp.eq.s32.totalorder %s30, 0
      %p247 = por %p245, %p246
      %p248 = scmp.ne.s32.totalorder %s236, %s237
      %p249 = scmp.eq.s32.totalorder %s31, 1
      %p250 = por %p248, %p249
      %p252 = scmp.ne.s32.totalorder %s237, %s251
      %p253 = scmp.eq.s32.totalorder %s31, 0
      %p254 = por %p252, %p253
      %s256 = sadd.s32 %s255, 1
      %p259 = scmp.eq.s32.totalorder %s25, 1
      %p260 = scmp.ne.s32.totalorder %s255, %s257
      %p261 = scmp.eq.s32.totalorder %s25, 0
      %p262 = por %p260, %p261
      %p263 = scmp.ne.s32.totalorder %s255, %s257
      %p264 = scmp.eq.s32.totalorder %s30, 1
      %p265 = por %p263, %p264
      %p266 = scmp.ne.s32.totalorder %s257, %s258
      %p267 = scmp.eq.s32.totalorder %s30, 0
      %p268 = por %p266, %p267
      %p269 = scmp.ne.s32.totalorder %s257, %s258
      %p270 = scmp.eq.s32.totalorder %s31, 1
      %p271 = por %p269, %p270
      %p273 = scmp.ne.s32.totalorder %s258, %s272
      %p274 = scmp.eq.s32.totalorder %s31, 0
      %p275 = por %p273, %p274
      %s277 = sadd.s32 %s276, 1
      %p280 = scmp.eq.s32.totalorder %s25, 1
      %p281 = scmp.ne.s32.totalorder %s276, %s278
      %p282 = scmp.eq.s32.totalorder %s25, 0
      %p283 = por %p281, %p282
      %p284 = scmp.ne.s32.totalorder %s276, %s278
      %p285 = scmp.eq.s32.totalorder %s30, 1
      %p286 = por %p284, %p285
      %p287 = scmp.ne.s32.totalorder %s278, %s279
      %p288 = scmp.eq.s32.totalorder %s30, 0
      %p289 = por %p287, %p288
      %p290 = scmp.ne.s32.totalorder %s278, %s279
      %p291 = scmp.eq.s32.totalorder %s31, 1
      %p292 = por %p290, %p291
      %p294 = scmp.ne.s32.totalorder %s279, %s293
      %p295 = scmp.eq.s32.totalorder %s31, 0
      %p296 = por %p294, %p295
      %s298 = sadd.s32 %s297, 1
      %p301 = scmp.eq.s32.totalorder %s25, 1
      %p302 = scmp.ne.s32.totalorder %s297, %s299
      %p303 = scmp.eq.s32.totalorder %s25, 0
      %p304 = por %p302, %p303
      %p305 = scmp.ne.s32.totalorder %s297, %s299
      %p306 = scmp.eq.s32.totalorder %s30, 1
      %p307 = por %p305, %p306
      %p308 = scmp.ne.s32.totalorder %s299, %s300
      %p309 = scmp.eq.s32.totalorder %s30, 0
      %p310 = por %p308, %p309
      %p311 = scmp.ne.s32.totalorder %s299, %s300
      %p312 = scmp.eq.s32.totalorder %s31, 1
      %p313 = por %p311, %p312
      %p315 = scmp.ne.s32.totalorder %s300, %s314
      %p316 = scmp.eq.s32.totalorder %s31, 0
      %p317 = por %p315, %p316
      %s319 = sadd.s32 %s318, 1
      %p322 = scmp.eq.s32.totalorder %s25, 1
      %p323 = scmp.ne.s32.totalorder %s318, %s320
      %p324 = scmp.eq.s32.totalorder %s25, 0
      %p325 = por %p323, %p324
      %p326 = scmp.ne.s32.totalorder %s318, %s320
      %p327 = scmp.eq.s32.totalorder %s30, 1
      %p328 = por %p326, %p327
      %p329 = scmp.ne.s32.totalorder %s320, %s321
      %p330 = scmp.eq.s32.totalorder %s30, 0
      %p331 = por %p329, %p330
      %p332 = scmp.ne.s32.totalorder %s320, %s321
      %p333 = scmp.eq.s32.totalorder %s31, 1
      %p334 = por %p332, %p333
      %p336 = scmp.ne.s32.totalorder %s321, %s335
      %p337 = scmp.eq.s32.totalorder %s31, 0
      %p338 = por %p336, %p337
      %s340 = sadd.s32 %s339, 1
      %p343 = scmp.eq.s32.totalorder %s25, 1
      %p344 = scmp.ne.s32.totalorder %s339, %s341
      %p345 = scmp.eq.s32.totalorder %s25, 0
      %p346 = por %p344, %p345
      %p347 = scmp.ne.s32.totalorder %s339, %s341
      %p348 = scmp.eq.s32.totalorder %s30, 1
      %p349 = por %p347, %p348
      %p350 = scmp.ne.s32.totalorder %s341, %s342
      %p351 = scmp.eq.s32.totalorder %s30, 0
      %p352 = por %p350, %p351
      %p353 = scmp.ne.s32.totalorder %s341, %s342
      %p354 = scmp.eq.s32.totalorder %s31, 1
      %p355 = por %p353, %p354
      %p357 = scmp.ne.s32.totalorder %s342, %s356
      %p358 = scmp.eq.s32.totalorder %s31, 0
      %p359 = por %p357, %p358
      %s361 = sadd.s32 %s360, 1
      %p364 = scmp.eq.s32.totalorder %s25, 1
      %p365 = scmp.ne.s32.totalorder %s360, %s362
      %p366 = scmp.eq.s32.totalorder %s25, 0
      %p367 = por %p365, %p366
      %p368 = scmp.ne.s32.totalorder %s360, %s362
      %p369 = scmp.eq.s32.totalorder %s30, 1
      %p370 = por %p368, %p369
      %p371 = scmp.ne.s32.totalorder %s362, %s363
      %p372 = scmp.eq.s32.totalorder %s30, 0
      %p373 = por %p371, %p372
      %p374 = scmp.ne.s32.totalorder %s362, %s363
      %p375 = scmp.eq.s32.totalorder %s31, 1
      %p376 = por %p374, %p375
      %p378 = scmp.ne.s32.totalorder %s363, %s377
      %p379 = scmp.eq.s32.totalorder %s31, 0
      %p380 = por %p378, %p379
      %s382 = sadd.s32 %s381, 1
      %p385 = scmp.eq.s32.totalorder %s25, 1
      %p386 = scmp.ne.s32.totalorder %s381, %s383
      %p387 = scmp.eq.s32.totalorder %s25, 0
      %p388 = por %p386, %p387
      %p389 = scmp.ne.s32.totalorder %s381, %s383
      %p390 = scmp.eq.s32.totalorder %s30, 1
      %p391 = por %p389, %p390
      %p392 = scmp.ne.s32.totalorder %s383, %s384
      %p393 = scmp.eq.s32.totalorder %s30, 0
      %p394 = por %p392, %p393
      %p395 = scmp.ne.s32.totalorder %s383, %s384
      %p396 = scmp.eq.s32.totalorder %s31, 1
      %p397 = por %p395, %p396
      %p399 = scmp.ne.s32.totalorder %s384, %s398
      %p400 = scmp.eq.s32.totalorder %s31, 0
      %p401 = por %p399, %p400
      %s402 = ssub.s32 %s32, %s44
      %s403 = ssub.s32 %s33, %s40
      %s404 = sor.u32 %s402, %s403
      %p405 = scmp.eq.s32.totalorder %s404, 0
      %s407 = sadd.s32 %s406, 1
      %s408 = scalar_select %p405, %s406, %s407
      %p411 = pneg %p405
      %p412 = scmp.eq.s32.totalorder %s25, 1
      %p413 = por %p411, %p412
      %p414 = scmp.ne.s32.totalorder %s406, %s409
      %p415 = scmp.eq.s32.totalorder %s25, 0
      %p416 = por %p414, %p415
      %p417 = scmp.ne.s32.totalorder %s406, %s409
      %p418 = scmp.eq.s32.totalorder %s30, 1
      %p419 = por %p417, %p418
      %p420 = scmp.ne.s32.totalorder %s409, %s410
      %p421 = scmp.eq.s32.totalorder %s30, 0
      %p422 = por %p420, %p421
      %p423 = scmp.ne.s32.totalorder %s409, %s410
      %p424 = scmp.eq.s32.totalorder %s31, 1
      %p425 = por %p423, %p424
      %p427 = scmp.ne.s32.totalorder %s410, %s426
      %p428 = scmp.eq.s32.totalorder %s31, 0
      %p429 = por %p427, %p428
      %p430 = scmp.le.s32.totalorder 1, %s25
      %p431 = scmp.lt.s32.totalorder %s25, 3
      %p432 = pnand %p430, %p431
      %p433 = pneg %p432
      // Predicated region
      $region9: #{tpu_custom_call.1} parent=5 // pred_check
        _
      $region10: #{tpu_custom_call.1} parent=5 // pred_check_branch
        %435 = sbr.rel (%p432) target = $region12
      $region11: #{tpu_custom_call.1} parent=5 // pred_region
        %s436 = ssub.s32 %s25, 1
        // Predicated region
        $region13: #{tpu_custom_call.1} parent=11 // pred_check
          %p437 = pneg %p142
        $region14: #{tpu_custom_call.1} parent=11 // pred_check_branch
          %439 = sbr.rel (%p437) target = $region16
        $region15: #{tpu_custom_call.1} parent=11 // pred_region
          _
        $region16: #{tpu_custom_call.1} parent=11 // pred_fallthru
          _
        // Predicated region
        $region17: #{tpu_custom_call.1} parent=11 // pred_check
          %p440 = pneg %p163
        $region18: #{tpu_custom_call.1} parent=11 // pred_check_branch
          %442 = sbr.rel (%p440) target = $region20
        $region19: #{tpu_custom_call.1} parent=11 // pred_region
          _
        $region20: #{tpu_custom_call.1} parent=11 // pred_fallthru
          _
        // Predicated region
        $region21: #{tpu_custom_call.1} parent=11 // pred_check
          %p443 = pneg %p184
        $region22: #{tpu_custom_call.1} parent=11 // pred_check_branch
          %445 = sbr.rel (%p443) target = $region24
        $region23: #{tpu_custom_call.1} parent=11 // pred_region
          _
        $region24: #{tpu_custom_call.1} parent=11 // pred_fallthru
          _
        // Predicated region
        $region25: #{tpu_custom_call.1} parent=11 // pred_check
          %p446 = pneg %p205
        $region26: #{tpu_custom_call.1} parent=11 // pred_check_branch
          %448 = sbr.rel (%p446) target = $region28
        $region27: #{tpu_custom_call.1} parent=11 // pred_region
          _
        $region28: #{tpu_custom_call.1} parent=11 // pred_fallthru
          _
        // Predicated region
        $region29: #{tpu_custom_call.1} parent=11 // pred_check
          %p449 = pneg %p226
        $region30: #{tpu_custom_call.1} parent=11 // pred_check_branch
          %451 = sbr.rel (%p449) target = $region32
        $region31: #{tpu_custom_call.1} parent=11 // pred_region
          _
        $region32: #{tpu_custom_call.1} parent=11 // pred_fallthru
          _
        // Predicated region
        $region33: #{tpu_custom_call.1} parent=11 // pred_check
          %p452 = pneg %p247
        $region34: #{tpu_custom_call.1} parent=11 // pred_check_branch
          %454 = sbr.rel (%p452) target = $region36
        $region35: #{tpu_custom_call.1} parent=11 // pred_region
          _
        $region36: #{tpu_custom_call.1} parent=11 // pred_fallthru
          _
        // Predicated region
        $region37: #{tpu_custom_call.1} parent=11 // pred_check
          %p455 = pneg %p268
        $region38: #{tpu_custom_call.1} parent=11 // pred_check_branch
          %457 = sbr.rel (%p455) target = $region40
        $region39: #{tpu_custom_call.1} parent=11 // pred_region
          _
        $region40: #{tpu_custom_call.1} parent=11 // pred_fallthru
          _
        // Predicated region
        $region41: #{tpu_custom_call.1} parent=11 // pred_check
          %p458 = pneg %p289
        $region42: #{tpu_custom_call.1} parent=11 // pred_check_branch
          %460 = sbr.rel (%p458) target = $region44
        $region43: #{tpu_custom_call.1} parent=11 // pred_region
          _
        $region44: #{tpu_custom_call.1} parent=11 // pred_fallthru
          _
        // Predicated region
        $region45: #{tpu_custom_call.1} parent=11 // pred_check
          %p461 = pneg %p310
        $region46: #{tpu_custom_call.1} parent=11 // pred_check_branch
          %463 = sbr.rel (%p461) target = $region48
        $region47: #{tpu_custom_call.1} parent=11 // pred_region
          _
        $region48: #{tpu_custom_call.1} parent=11 // pred_fallthru
          _
        // Predicated region
        $region49: #{tpu_custom_call.1} parent=11 // pred_check
          %p464 = pneg %p331
        $region50: #{tpu_custom_call.1} parent=11 // pred_check_branch
          %466 = sbr.rel (%p464) target = $region52
        $region51: #{tpu_custom_call.1} parent=11 // pred_region
          _
        $region52: #{tpu_custom_call.1} parent=11 // pred_fallthru
          _
        // Predicated region
        $region53: #{tpu_custom_call.1} parent=11 // pred_check
          %p467 = pneg %p352
        $region54: #{tpu_custom_call.1} parent=11 // pred_check_branch
          %469 = sbr.rel (%p467) target = $region56
        $region55: #{tpu_custom_call.1} parent=11 // pred_region
          _
        $region56: #{tpu_custom_call.1} parent=11 // pred_fallthru
          _
        // Predicated region
        $region57: #{tpu_custom_call.1} parent=11 // pred_check
          %p470 = pneg %p373
        $region58: #{tpu_custom_call.1} parent=11 // pred_check_branch
          %472 = sbr.rel (%p470) target = $region60
        $region59: #{tpu_custom_call.1} parent=11 // pred_region
          _
        $region60: #{tpu_custom_call.1} parent=11 // pred_fallthru
          _
        // Predicated region
        $region61: #{tpu_custom_call.1} parent=11 // pred_check
          %p473 = pneg %p394
        $region62: #{tpu_custom_call.1} parent=11 // pred_check_branch
          %475 = sbr.rel (%p473) target = $region64
        $region63: #{tpu_custom_call.1} parent=11 // pred_region
          _
        $region64: #{tpu_custom_call.1} parent=11 // pred_fallthru
          _
      $region12: #{tpu_custom_call.1} parent=5 // pred_fallthru
        _
      %p476 = scmp.lt.s32.totalorder %s25, 2
      // Predicated region
      $region65: #{tpu_custom_call.1} parent=5 // pred_check
        %p477 = pneg %p476
      $region66: #{tpu_custom_call.1} parent=5 // pred_check_branch
        %479 = sbr.rel (%p477) target = $region68
      $region67: #{tpu_custom_call.1} parent=5 // pred_region
        // Predicated region
        $region69: #{tpu_custom_call.1} parent=67 // pred_check
          %p480 = pneg %p59
        $region70: #{tpu_custom_call.1} parent=67 // pred_check_branch
          %482 = sbr.rel (%p480) target = $region72
        $region71: #{tpu_custom_call.1} parent=67 // pred_region
          %p483 = scmp.lt.s32.totalorder %s32, 1
          %s484 = scalar_select %p483, %s32, 1
          %p485 = scmp.lt.s32.totalorder %s33, 0
          %s486 = scalar_select %p485, %s33, 0
          %s487 = smul.addr %s484, 4
          %s488 = sadd.s32 %s486, %s487
          %s489 = smul.addr %s488, 8
          %s490 = scalar_lea.vmem %s0, %s489
        $region72: #{tpu_custom_call.1} parent=67 // pred_fallthru
          _
        // Predicated region
        $region73: #{tpu_custom_call.1} parent=67 // pred_check
          %p491 = pneg %p87
        $region74: #{tpu_custom_call.1} parent=67 // pred_check_branch
          %493 = sbr.rel (%p491) target = $region76
        $region75: #{tpu_custom_call.1} parent=67 // pred_region
          %p494 = scmp.lt.s32.totalorder %s32, 1
          %s495 = scalar_select %p494, %s32, 1
          %p496 = scmp.lt.s32.totalorder %s33, 0
          %s497 = scalar_select %p496, %s33, 0
          %s498 = sadd.s32 %s497, %s495
          %s499 = smul.addr %s498, 8
          %s500 = scalar_lea.vmem %s1, %s499
        $region76: #{tpu_custom_call.1} parent=67 // pred_fallthru
          _
        // Predicated region
        $region77: #{tpu_custom_call.1} parent=67 // pred_check
          %p501 = pneg %p115
        $region78: #{tpu_custom_call.1} parent=67 // pred_check_branch
          %503 = sbr.rel (%p501) target = $region80
        $region79: #{tpu_custom_call.1} parent=67 // pred_region
          %p504 = scmp.lt.s32.totalorder %s32, 1
          %s505 = scalar_select %p504, %s32, 1
          %p506 = scmp.lt.s32.totalorder %s33, 0
          %s507 = scalar_select %p506, %s33, 0
          %s508 = smul.addr %s505, 4
          %s509 = sadd.s32 %s507, %s508
          %s510 = smul.addr %s509, 8
          %s511 = scalar_lea.vmem %s2, %s510
        $region80: #{tpu_custom_call.1} parent=67 // pred_fallthru
          _
      $region68: #{tpu_custom_call.1} parent=5 // pred_fallthru
        _
      %p512 = scmp.le.s32.totalorder 1, %s25
      %p513 = scmp.lt.s32.totalorder %s25, 3
      %p514 = pnand %p512, %p513
      %p515 = pneg %p514
      // Predicated region
      $region81: #{tpu_custom_call.1} parent=5 // pred_check
        _
      $region82: #{tpu_custom_call.1} parent=5 // pred_check_branch
        %517 = sbr.rel (%p514) target = $region84
      $region83: #{tpu_custom_call.1} parent=5 // pred_region
        %s518 = ssub.s32 %s25, 1
        %p519 = scmp.lt.s32.totalorder %s34, 1
        %s520 = scalar_select %p519, %s34, 1
        %p521 = scmp.lt.s32.totalorder %s35, 0
        %s522 = scalar_select %p521, %s35, 0
        %s523 = smul.addr %s520, 4
        %s524 = sadd.s32 %s522, %s523
        %s525 = smul.addr %s524, 8
        %s526 = scalar_lea.vmem %s0, %s525
        %p527 = pneg %p65
        %p528 = pneg %p62
        %p529 = scmp.lt.s32.totalorder %s34, 1
        %s530 = scalar_select %p529, %s34, 1
        %p531 = scmp.lt.s32.totalorder %s35, 0
        %s532 = scalar_select %p531, %s35, 0
        %s533 = sadd.s32 %s532, %s530
        %s534 = smul.addr %s533, 8
        %s535 = scalar_lea.vmem %s1, %s534
        %p536 = pneg %p93
        %p537 = pneg %p90
        %p538 = scmp.lt.s32.totalorder %s34, 1
        %s539 = scalar_select %p538, %s34, 1
        %p540 = scmp.lt.s32.totalorder %s35, 0
        %s541 = scalar_select %p540, %s35, 0
        %s542 = smul.addr %s539, 4
        %s543 = sadd.s32 %s541, %s542
        %s544 = smul.addr %s543, 8
        %s545 = scalar_lea.vmem %s2, %s544
        %p546 = pneg %p121
        %p547 = pneg %p118
        %p548 = pneg %p142
        %p549 = pneg %p139
        %p550 = pneg %p163
        %p551 = pneg %p160
        %p552 = pneg %p184
        %p553 = pneg %p181
        %p554 = pneg %p205
        %p555 = pneg %p202
        %p556 = pneg %p226
        %p557 = pneg %p223
        %p558 = pneg %p247
        %p559 = pneg %p244
        %p560 = pneg %p268
        %p561 = pneg %p265
        %p562 = pneg %p289
        %p563 = pneg %p286
        %p564 = pneg %p310
        %p565 = pneg %p307
        %p566 = pneg %p331
        %p567 = pneg %p328
        %p568 = pneg %p352
        %p569 = pneg %p349
        %p570 = pneg %p373
        %p571 = pneg %p370
        %p572 = pneg %p394
        %p573 = pneg %p391
        %p574 = pneg %p422
        %p575 = pneg %p419
        %s576 = sand.u32 %s409, 1
        %s577 = scalar_lea.sflag [#allocation3], %s576
        %s578 = sand.u32 %s409, 1
        %s579 = smul.addr %s578, 8
        %s580 = scalar_lea.vmem [#allocation2], %s579
        %p581 = scmp.lt.s32.totalorder %s34, 1
        %s582 = scalar_select %p581, %s34, 1
        %p583 = scmp.lt.s32.totalorder %s35, 0
        %s584 = scalar_select %p583, %s35, 0
        %s585 = smul.addr %s582, 4
        %s586 = sadd.s32 %s584, %s585
        %s587 = smul.addr %s586, 8
        %s588 = scalar_lea.vmem %s0, %s587
        %p589 = scmp.lt.s32.totalorder %s34, 1
        %s590 = scalar_select %p589, %s34, 1
        %p591 = scmp.lt.s32.totalorder %s35, 0
        %s592 = scalar_select %p591, %s35, 0
        %s593 = sadd.s32 %s592, %s590
        %s594 = smul.addr %s593, 8
        %s595 = scalar_lea.vmem %s1, %s594
        %p596 = scmp.lt.s32.totalorder %s34, 1
        %s597 = scalar_select %p596, %s34, 1
        %p598 = scmp.lt.s32.totalorder %s35, 0
        %s599 = scalar_select %p598, %s35, 0
        %s600 = smul.addr %s597, 4
        %s601 = sadd.s32 %s599, %s600
        %s602 = smul.addr %s601, 8
        %s603 = scalar_lea.vmem %s2, %s602
        %v604 = vld [vmem:[%s3] sm:$0x7]
        %v605 = vld [vmem:[%s4] sm:$0x1]
        %v606 = vld [vmem:[%s5] sm:$0x3]
        %v607 = vld [vmem:[%s6] sm:$0x1]
        %v608 = vld [vmem:[%s588] sm:$0xff]
        %610 = vset.pattern.permute.xlu0 0
        %611 = vperm.xlu0 %610, %v608
        %v612 = vpop.permute.xlu0 %611
        %v614 = vperm.slane %v604, 0
        %v615 = vmul.f32 %v612, %v614
        %616 = vset.pattern.permute.xlu0 1
        %617 = vperm.xlu0 %616, %v608
        %v618 = vpop.permute.xlu0 %617
        %v620 = vperm.slane %v604, 1
        %v621 = vmul.f32 %v618, %v620
        %v622 = vadd.f32 %v615, %v621
        %623 = vset.pattern.permute.xlu0 2
        %624 = vperm.xlu0 %623, %v608
        %v625 = vpop.permute.xlu0 %624
        %v627 = vperm.slane %v604, 2
        %v628 = vmul.f32 %v625, %v627
        %v629 = vadd.f32 %v622, %v628
        %v631 = vperm.slane %v605, 0
        %v633 = vadd.f32 %v629, %v631
        %v634 = vmax.f32 %v633, 0.0
        %v636 = vperm.slane %v607, 0
        %vm638 = vcmask 15360
        %v640 = vsel %vm638, %v634, 0
        %vm642 = vcmask 1041408
        %v644 = vsel %vm642, %v606, 0
        %646 = vmatpush.msra.mxu0 0.0
        %647 = vmatpush.msra.mxu0 0.0
        %648 = vmatpush.msra.mxu0 0.0
        %649 = vmatpush.msra.mxu0 0.0
        %650 = vmatpush.msra.mxu0 0.0
        %651 = vmatpush.msra.mxu0 0.0
        %652 = vmatpush.msra.mxu0 0.0
        %653 = vmatpush.msra.mxu0 0.0
        %654 = vmatpush.msra.mxu0 0.0
        %655 = vmatpush.msra.mxu0 0.0
        %656 = vmatpush.msra.mxu0 0.0
        %657 = vmatpush.msra.mxu0 0.0
        %658 = vmatpush.msra.mxu0 0.0
        %659 = vmatpush.msra.mxu0 0.0
        %660 = vmatpush.msra.mxu0 0.0
        %661 = vmatpush.msra.mxu0 %v644
        %662 = vmatmul.f32.gmra.mxu0 %v640
        %v663 = vpop.f32.mrf.mxu0
        %v664 = vadd.f32 %v636, %v663
        %665 = vdwg.mxu0
        %v666 = vmax.f32 %v664, 0.0
        %s667 = scalar_lea.vmem %s588, 8
        %v668 = vld [vmem:[%s667] sm:$0xff]
        %670 = vset.pattern.permute.xlu0 0
        %671 = vperm.xlu0 %670, %v668
        %v672 = vpop.permute.xlu0 %671
        %v674 = vmul.f32 %v672, %v614
        %675 = vset.pattern.permute.xlu0 1
        %676 = vperm.xlu0 %675, %v668
        %v677 = vpop.permute.xlu0 %676
        %v679 = vmul.f32 %v677, %v620
        %v680 = vadd.f32 %v674, %v679
        %681 = vset.pattern.permute.xlu0 2
        %682 = vperm.xlu0 %681, %v668
        %v683 = vpop.permute.xlu0 %682
        %v685 = vmul.f32 %v683, %v627
        %v686 = vadd.f32 %v680, %v685
        %v687 = vadd.f32 %v686, %v631
        %v688 = vmax.f32 %v687, 0.0
        %v690 = vsel %vm638, %v688, 0
        %692 = vmatpush.msra.mxu0 0.0
        %693 = vmatpush.msra.mxu0 0.0
        %694 = vmatpush.msra.mxu0 0.0
        %695 = vmatpush.msra.mxu0 0.0
        %696 = vmatpush.msra.mxu0 0.0
        %697 = vmatpush.msra.mxu0 0.0
        %698 = vmatpush.msra.mxu0 0.0
        %699 = vmatpush.msra.mxu0 0.0
        %700 = vmatpush.msra.mxu0 0.0
        %701 = vmatpush.msra.mxu0 0.0
        %702 = vmatpush.msra.mxu0 0.0
        %703 = vmatpush.msra.mxu0 0.0
        %704 = vmatpush.msra.mxu0 0.0
        %705 = vmatpush.msra.mxu0 0.0
        %706 = vmatpush.msra.mxu0 0.0
        %707 = vmatpush.msra.mxu0 %v644
        %708 = vmatmul.f32.gmra.mxu0 %v690
        %v709 = vpop.f32.mrf.mxu0
        %v710 = vadd.f32 %v636, %v709
        %711 = vdwg.mxu0
        %v712 = vmax.f32 %v710, 0.0
        %s713 = scalar_lea.vmem %s588, 16
        %v714 = vld [vmem:[%s713] sm:$0xff]
        %716 = vset.pattern.permute.xlu0 0
        %717 = vperm.xlu0 %716, %v714
        %v718 = vpop.permute.xlu0 %717
        %v720 = vmul.f32 %v718, %v614
        %721 = vset.pattern.permute.xlu0 1
        %722 = vperm.xlu0 %721, %v714
        %v723 = vpop.permute.xlu0 %722
        %v725 = vmul.f32 %v723, %v620
        %v726 = vadd.f32 %v720, %v725
        %727 = vset.pattern.permute.xlu0 2
        %728 = vperm.xlu0 %727, %v714
        %v729 = vpop.permute.xlu0 %728
        %v731 = vmul.f32 %v729, %v627
        %v732 = vadd.f32 %v726, %v731
        %v733 = vadd.f32 %v732, %v631
        %v734 = vmax.f32 %v733, 0.0
        %v736 = vsel %vm638, %v734, 0
        %738 = vmatpush.msra.mxu0 0.0
        %739 = vmatpush.msra.mxu0 0.0
        %740 = vmatpush.msra.mxu0 0.0
        %741 = vmatpush.msra.mxu0 0.0
        %742 = vmatpush.msra.mxu0 0.0
        %743 = vmatpush.msra.mxu0 0.0
        %744 = vmatpush.msra.mxu0 0.0
        %745 = vmatpush.msra.mxu0 0.0
        %746 = vmatpush.msra.mxu0 0.0
        %747 = vmatpush.msra.mxu0 0.0
        %748 = vmatpush.msra.mxu0 0.0
        %749 = vmatpush.msra.mxu0 0.0
        %750 = vmatpush.msra.mxu0 0.0
        %751 = vmatpush.msra.mxu0 0.0
        %752 = vmatpush.msra.mxu0 0.0
        %753 = vmatpush.msra.mxu0 %v644
        %754 = vmatmul.f32.gmra.mxu0 %v736
        %v755 = vpop.f32.mrf.mxu0
        %v756 = vadd.f32 %v636, %v755
        %757 = vdwg.mxu0
        %v758 = vmax.f32 %v756, 0.0
        %s759 = scalar_lea.vmem %s588, 24
        %v760 = vld [vmem:[%s759] sm:$0xff]
        %762 = vset.pattern.permute.xlu0 0
        %763 = vperm.xlu0 %762, %v760
        %v764 = vpop.permute.xlu0 %763
        %v766 = vmul.f32 %v764, %v614
        %767 = vset.pattern.permute.xlu0 1
        %768 = vperm.xlu0 %767, %v760
        %v769 = vpop.permute.xlu0 %768
        %v771 = vmul.f32 %v769, %v620
        %v772 = vadd.f32 %v766, %v771
        %773 = vset.pattern.permute.xlu0 2
        %774 = vperm.xlu0 %773, %v760
        %v775 = vpop.permute.xlu0 %774
        %v777 = vmul.f32 %v775, %v627
        %v778 = vadd.f32 %v772, %v777
        %v779 = vadd.f32 %v778, %v631
        %v780 = vmax.f32 %v779, 0.0
        %v782 = vsel %vm638, %v780, 0
        %784 = vmatpush.msra.mxu0 0.0
        %785 = vmatpush.msra.mxu0 0.0
        %786 = vmatpush.msra.mxu0 0.0
        %787 = vmatpush.msra.mxu0 0.0
        %788 = vmatpush.msra.mxu0 0.0
        %789 = vmatpush.msra.mxu0 0.0
        %790 = vmatpush.msra.mxu0 0.0
        %791 = vmatpush.msra.mxu0 0.0
        %792 = vmatpush.msra.mxu0 0.0
        %793 = vmatpush.msra.mxu0 0.0
        %794 = vmatpush.msra.mxu0 0.0
        %795 = vmatpush.msra.mxu0 0.0
        %796 = vmatpush.msra.mxu0 0.0
        %797 = vmatpush.msra.mxu0 0.0
        %798 = vmatpush.msra.mxu0 0.0
        %799 = vmatpush.msra.mxu0 %v644
        %800 = vmatmul.f32.gmra.mxu0 %v782
        %v801 = vpop.f32.mrf.mxu0
        %v802 = vadd.f32 %v636, %v801
        %803 = vdwg.mxu0
        %v804 = vmax.f32 %v802, 0.0
        %v805 = vld [vmem:[%s595] sm:$0xff]
        %v806 = vld [vmem:[%s7] sm:$0xff]
        %v807 = vld [vmem:[%s7 + $0x8] sm:$0xf]
        %v808 = vld [vmem:[%s8] sm:$0x1]
        %v810 = vperm.slane %v808, 0
        %vm812 = vcmask 97280
        %v814 = vsel %vm812, %v805, 0
        %vm816 = vcmask 1043456
        %v818 = vsel %vm816, %v807, 0
        %820 = vmatpush.msra.mxu0 0.0
        %821 = vmatpush.msra.mxu0 0.0
        %822 = vmatpush.msra.mxu0 0.0
        %823 = vmatpush.msra.mxu0 0.0
        %824 = vmatpush.msra.mxu0 0.0
        %825 = vmatpush.msra.mxu0 0.0
        %826 = vmatpush.msra.mxu0 0.0
        %827 = vmatpush.msra.mxu0 0.0
        %828 = vmatpush.msra.mxu0 0.0
        %829 = vmatpush.msra.mxu0 0.0
        %830 = vmatpush.msra.mxu0 0.0
        %831 = vmatpush.msra.mxu0 0.0
        %832 = vmatpush.msra.mxu0 0.0
        %833 = vmatpush.msra.mxu0 0.0
        %834 = vmatpush.msra.mxu0 %v818
        %835 = vmatpush.msra.mxu0 %v806
        %836 = vmatmul.f32.gmra.mxu0 %v814
        %v837 = vpop.f32.mrf.mxu0
        %v838 = vadd.f32 %v810, %v837
        %839 = vdwg.mxu0
        %v840 = vmax.f32 %v838, 0.0
        %v841 = vld [vmem:[%s9] sm:$0xff]
        %v842 = vld [vmem:[%s9 + $0x8] sm:$0xff]
        %v843 = vld [vmem:[%s10] sm:$0x1]
        %v845 = vperm.slane %v843, 0
        %vm847 = vcmask 130048
        %v849 = vsel %vm847, %v840, 0
        %851 = vmatpush.msra.mxu0 0.0
        %852 = vmatpush.msra.mxu0 0.0
        %853 = vmatpush.msra.mxu0 0.0
        %854 = vmatpush.msra.mxu0 0.0
        %855 = vmatpush.msra.mxu0 0.0
        %856 = vmatpush.msra.mxu0 0.0
        %857 = vmatpush.msra.mxu0 0.0
        %858 = vmatpush.msra.mxu0 0.0
        %859 = vmatpush.msra.mxu0 0.0
        %860 = vmatpush.msra.mxu0 0.0
        %861 = vmatpush.msra.mxu0 0.0
        %862 = vmatpush.msra.mxu0 0.0
        %863 = vmatpush.msra.mxu0 0.0
        %864 = vmatpush.msra.mxu0 0.0
        %865 = vmatpush.msra.mxu0 %v842
        %866 = vmatpush.msra.mxu0 %v841
        %867 = vmatmul.f32.gmra.mxu0 %v849
        %v868 = vpop.f32.mrf.mxu0
        %v869 = vadd.f32 %v845, %v868
        %870 = vdwg.mxu0
        %v871 = vmax.f32 %v869, 0.0
        %v872 = vld [vmem:[%s11] sm:$0xff]
        %v873 = vld [vmem:[%s11 + $0x8] sm:$0xff]
        %v874 = vld [vmem:[%s12] sm:$0x1]
        %v876 = vperm.slane %v874, 0
        %v879 = vsel %vm847, %v871, 0
        %881 = vmatpush.msra.mxu0 0.0
        %882 = vmatpush.msra.mxu0 0.0
        %883 = vmatpush.msra.mxu0 0.0
        %884 = vmatpush.msra.mxu0 0.0
        %885 = vmatpush.msra.mxu0 0.0
        %886 = vmatpush.msra.mxu0 0.0
        %887 = vmatpush.msra.mxu0 0.0
        %888 = vmatpush.msra.mxu0 0.0
        %889 = vmatpush.msra.mxu0 0.0
        %890 = vmatpush.msra.mxu0 0.0
        %891 = vmatpush.msra.mxu0 0.0
        %892 = vmatpush.msra.mxu0 0.0
        %893 = vmatpush.msra.mxu0 0.0
        %894 = vmatpush.msra.mxu0 0.0
        %895 = vmatpush.msra.mxu0 %v873
        %896 = vmatpush.msra.mxu0 %v872
        %897 = vmatmul.f32.gmra.mxu0 %v879
        %v898 = vpop.f32.mrf.mxu0
        %v899 = vadd.f32 %v876, %v898
        %900 = vdwg.mxu0
        %902 = vset.pattern.permute.xlu0 0
        %903 = vperm.xlu0 %902, %v899
        %v904 = vpop.permute.xlu0 %903
        %v906 = vmul.f32 %v904, %v666
        %v907 = vld [vmem:[%s603] sm:$0xff]
        %v908 = vmul.f32 %v904, %v907
        %909 = vset.pattern.permute.xlu0 1
        %910 = vperm.xlu0 %909, %v899
        %v911 = vpop.permute.xlu0 %910
        %v913 = vmul.f32 %v911, %v712
        %v914 = vadd.f32 %v906, %v913
        %s915 = scalar_lea.vmem %s603, 8
        %v916 = vld [vmem:[%s915] sm:$0xff]
        %v917 = vmul.f32 %v911, %v916
        %v918 = vadd.f32 %v908, %v917
        %919 = vset.pattern.permute.xlu0 2
        %920 = vperm.xlu0 %919, %v899
        %v921 = vpop.permute.xlu0 %920
        %v923 = vmul.f32 %v921, %v758
        %v924 = vadd.f32 %v914, %v923
        %s925 = scalar_lea.vmem %s603, 16
        %v926 = vld [vmem:[%s925] sm:$0xff]
        %v927 = vmul.f32 %v921, %v926
        %v928 = vadd.f32 %v918, %v927
        %929 = vset.pattern.permute.xlu0 3
        %930 = vperm.xlu0 %929, %v899
        %v931 = vpop.permute.xlu0 %930
        %v933 = vmul.f32 %v931, %v804
        %v934 = vadd.f32 %v924, %v933
        %s935 = scalar_lea.vmem %s603, 24
        %v936 = vld [vmem:[%s935] sm:$0xff]
        %v937 = vmul.f32 %v931, %v936
        %v938 = vadd.f32 %v928, %v937
        %v939 = vld [vmem:[%s13] sm:$0x3]
        %v940 = vld [vmem:[%s14] sm:$0xf]
        %vm941 = vcmask 31744
        %v943 = vsel %vm941, %v938, 0
        %v946 = vsel %vm816, %v940, 0
        %948 = vmatpush.msra.mxu0 0.0
        %949 = vmatpush.msra.mxu0 0.0
        %950 = vmatpush.msra.mxu0 0.0
        %951 = vmatpush.msra.mxu0 0.0
        %952 = vmatpush.msra.mxu0 0.0
        %953 = vmatpush.msra.mxu0 0.0
        %954 = vmatpush.msra.mxu0 0.0
        %955 = vmatpush.msra.mxu0 0.0
        %956 = vmatpush.msra.mxu0 0.0
        %957 = vmatpush.msra.mxu0 0.0
        %958 = vmatpush.msra.mxu0 0.0
        %959 = vmatpush.msra.mxu0 0.0
        %960 = vmatpush.msra.mxu0 0.0
        %961 = vmatpush.msra.mxu0 0.0
        %962 = vmatpush.msra.mxu0 0.0
        %963 = vmatpush.msra.mxu0 %v946
        %964 = vmatmul.f32.gmra.mxu0 %v943
        %v965 = vpop.f32.mrf.mxu0
        %v966 = vadd.f32 0.0, %v965
        %967 = vdwg.mxu0
        %v969 = vsel %vm638, %v934, 0
        %v972 = vsel %vm642, %v939, 0
        %974 = vmatpush.msra.mxu0 0.0
        %975 = vmatpush.msra.mxu0 0.0
        %976 = vmatpush.msra.mxu0 0.0
        %977 = vmatpush.msra.mxu0 0.0
        %978 = vmatpush.msra.mxu0 0.0
        %979 = vmatpush.msra.mxu0 0.0
        %980 = vmatpush.msra.mxu0 0.0
        %981 = vmatpush.msra.mxu0 0.0
        %982 = vmatpush.msra.mxu0 0.0
        %983 = vmatpush.msra.mxu0 0.0
        %984 = vmatpush.msra.mxu0 0.0
        %985 = vmatpush.msra.mxu0 0.0
        %986 = vmatpush.msra.mxu0 0.0
        %987 = vmatpush.msra.mxu0 0.0
        %988 = vmatpush.msra.mxu0 0.0
        %989 = vmatpush.msra.mxu0 %v972
        %990 = vmatmul.f32.gmra.mxu0 %v969
        %v991 = vpop.f32.mrf.mxu0
        %v992 = vadd.f32 %v966, %v991
        %993 = vdwg.mxu0
        %994 = vset.pattern.permute.xlu0 4
        %995 = vperm.xlu0 %994, %v899
        %v996 = vpop.permute.xlu0 %995
        %v998 = vmul.f32 %v996, %v666
        %v999 = vmul.f32 %v996, %v907
        %1000 = vset.pattern.permute.xlu0 5
        %1001 = vperm.xlu0 %1000, %v899
        %v1002 = vpop.permute.xlu0 %1001
        %v1004 = vmul.f32 %v1002, %v712
        %v1005 = vadd.f32 %v998, %v1004
        %v1006 = vmul.f32 %v1002, %v916
        %v1007 = vadd.f32 %v999, %v1006
        %1008 = vset.pattern.permute.xlu0 6
        %1009 = vperm.xlu0 %1008, %v899
        %v1010 = vpop.permute.xlu0 %1009
        %v1012 = vmul.f32 %v1010, %v758
        %v1013 = vadd.f32 %v1005, %v1012
        %v1014 = vmul.f32 %v1010, %v926
        %v1015 = vadd.f32 %v1007, %v1014
        %1016 = vset.pattern.permute.xlu0 7
        %1017 = vperm.xlu0 %1016, %v899
        %v1018 = vpop.permute.xlu0 %1017
        %v1020 = vmul.f32 %v1018, %v804
        %v1021 = vadd.f32 %v1013, %v1020
        %v1022 = vmul.f32 %v1018, %v936
        %v1023 = vadd.f32 %v1015, %v1022
        %s1024 = scalar_lea.vmem %s13, 2
        %v1025 = vld [vmem:[%s1024] sm:$0x3]
        %v1027 = vsel %vm638, %v1021, 0
        %v1030 = vsel %vm642, %v1025, 0
        %1032 = vmatpush.msra.mxu0 0.0
        %1033 = vmatpush.msra.mxu0 0.0
        %1034 = vmatpush.msra.mxu0 0.0
        %1035 = vmatpush.msra.mxu0 0.0
        %1036 = vmatpush.msra.mxu0 0.0
        %1037 = vmatpush.msra.mxu0 0.0
        %1038 = vmatpush.msra.mxu0 0.0
        %1039 = vmatpush.msra.mxu0 0.0
        %1040 = vmatpush.msra.mxu0 0.0
        %1041 = vmatpush.msra.mxu0 0.0
        %1042 = vmatpush.msra.mxu0 0.0
        %1043 = vmatpush.msra.mxu0 0.0
        %1044 = vmatpush.msra.mxu0 0.0
        %1045 = vmatpush.msra.mxu0 0.0
        %1046 = vmatpush.msra.mxu0 0.0
        %1047 = vmatpush.msra.mxu0 %v1030
        %1048 = vmatmul.f32.gmra.mxu0 %v1027
        %v1049 = vpop.f32.mrf.mxu0
        %v1050 = vadd.f32 0.0, %v1049
        %1051 = vdwg.mxu0
        %v1052 = vadd.f32 %v992, %v1050
        %s1053 = scalar_lea.vmem %s14, 4
        %v1054 = vld [vmem:[%s1053] sm:$0xf]
        %v1056 = vsel %vm941, %v1023, 0
        %v1059 = vsel %vm816, %v1054, 0
        %1061 = vmatpush.msra.mxu0 0.0
        %1062 = vmatpush.msra.mxu0 0.0
        %1063 = vmatpush.msra.mxu0 0.0
        %1064 = vmatpush.msra.mxu0 0.0
        %1065 = vmatpush.msra.mxu0 0.0
        %1066 = vmatpush.msra.mxu0 0.0
        %1067 = vmatpush.msra.mxu0 0.0
        %1068 = vmatpush.msra.mxu0 0.0
        %1069 = vmatpush.msra.mxu0 0.0
        %1070 = vmatpush.msra.mxu0 0.0
        %1071 = vmatpush.msra.mxu0 0.0
        %1072 = vmatpush.msra.mxu0 0.0
        %1073 = vmatpush.msra.mxu0 0.0
        %1074 = vmatpush.msra.mxu0 0.0
        %1075 = vmatpush.msra.mxu0 0.0
        %1076 = vmatpush.msra.mxu0 %v1059
        %1077 = vmatmul.f32.gmra.mxu0 %v1056
        %v1078 = vpop.f32.mrf.mxu0
        %v1079 = vadd.f32 0.0, %v1078
        %1080 = vdwg.mxu0
        %v1081 = vadd.f32 %v1052, %v1079
        %1082 = vset.pattern.permute.xlu0 8
        %1083 = vperm.xlu0 %1082, %v899
        %v1084 = vpop.permute.xlu0 %1083
        %v1086 = vmul.f32 %v1084, %v666
        %v1087 = vmul.f32 %v1084, %v907
        %1088 = vset.pattern.permute.xlu0 9
        %1089 = vperm.xlu0 %1088, %v899
        %v1090 = vpop.permute.xlu0 %1089
        %v1092 = vmul.f32 %v1090, %v712
        %v1093 = vadd.f32 %v1086, %v1092
        %v1094 = vmul.f32 %v1090, %v916
        %v1095 = vadd.f32 %v1087, %v1094
        %1096 = vset.pattern.permute.xlu0 10
        %1097 = vperm.xlu0 %1096, %v899
        %v1098 = vpop.permute.xlu0 %1097
        %v1100 = vmul.f32 %v1098, %v758
        %v1101 = vadd.f32 %v1093, %v1100
        %v1102 = vmul.f32 %v1098, %v926
        %v1103 = vadd.f32 %v1095, %v1102
        %1104 = vset.pattern.permute.xlu0 11
        %1105 = vperm.xlu0 %1104, %v899
        %v1106 = vpop.permute.xlu0 %1105
        %v1108 = vmul.f32 %v1106, %v804
        %v1109 = vadd.f32 %v1101, %v1108
        %v1110 = vmul.f32 %v1106, %v936
        %v1111 = vadd.f32 %v1103, %v1110
        %s1112 = scalar_lea.vmem %s13, 4
        %v1113 = vld [vmem:[%s1112] sm:$0x3]
        %v1115 = vsel %vm638, %v1109, 0
        %v1118 = vsel %vm642, %v1113, 0
        %1120 = vmatpush.msra.mxu0 0.0
        %1121 = vmatpush.msra.mxu0 0.0
        %1122 = vmatpush.msra.mxu0 0.0
        %1123 = vmatpush.msra.mxu0 0.0
        %1124 = vmatpush.msra.mxu0 0.0
        %1125 = vmatpush.msra.mxu0 0.0
        %1126 = vmatpush.msra.mxu0 0.0
        %1127 = vmatpush.msra.mxu0 0.0
        %1128 = vmatpush.msra.mxu0 0.0
        %1129 = vmatpush.msra.mxu0 0.0
        %1130 = vmatpush.msra.mxu0 0.0
        %1131 = vmatpush.msra.mxu0 0.0
        %1132 = vmatpush.msra.mxu0 0.0
        %1133 = vmatpush.msra.mxu0 0.0
        %1134 = vmatpush.msra.mxu0 0.0
        %1135 = vmatpush.msra.mxu0 %v1118
        %1136 = vmatmul.f32.gmra.mxu0 %v1115
        %v1137 = vpop.f32.mrf.mxu0
        %v1138 = vadd.f32 0.0, %v1137
        %1139 = vdwg.mxu0
        %v1140 = vadd.f32 %v1081, %v1138
        %s1141 = scalar_lea.vmem %s14, 8
        %v1142 = vld [vmem:[%s1141] sm:$0xf]
        %v1144 = vsel %vm941, %v1111, 0
        %v1147 = vsel %vm816, %v1142, 0
        %1149 = vmatpush.msra.mxu0 0.0
        %1150 = vmatpush.msra.mxu0 0.0
        %1151 = vmatpush.msra.mxu0 0.0
        %1152 = vmatpush.msra.mxu0 0.0
        %1153 = vmatpush.msra.mxu0 0.0
        %1154 = vmatpush.msra.mxu0 0.0
        %1155 = vmatpush.msra.mxu0 0.0
        %1156 = vmatpush.msra.mxu0 0.0
        %1157 = vmatpush.msra.mxu0 0.0
        %1158 = vmatpush.msra.mxu0 0.0
        %1159 = vmatpush.msra.mxu0 0.0
        %1160 = vmatpush.msra.mxu0 0.0
        %1161 = vmatpush.msra.mxu0 0.0
        %1162 = vmatpush.msra.mxu0 0.0
        %1163 = vmatpush.msra.mxu0 0.0
        %1164 = vmatpush.msra.mxu0 %v1147
        %1165 = vmatmul.f32.gmra.mxu0 %v1144
        %v1166 = vpop.f32.mrf.mxu0
        %v1167 = vadd.f32 0.0, %v1166
        %1168 = vdwg.mxu0
        %v1169 = vadd.f32 %v1140, %v1167
        %1170 = vset.pattern.permute.xlu0 12
        %1171 = vperm.xlu0 %1170, %v899
        %v1172 = vpop.permute.xlu0 %1171
        %v1174 = vmul.f32 %v1172, %v666
        %v1175 = vmul.f32 %v1172, %v907
        %1176 = vset.pattern.permute.xlu0 13
        %1177 = vperm.xlu0 %1176, %v899
        %v1178 = vpop.permute.xlu0 %1177
        %v1180 = vmul.f32 %v1178, %v712
        %v1181 = vadd.f32 %v1174, %v1180
        %v1182 = vmul.f32 %v1178, %v916
        %v1183 = vadd.f32 %v1175, %v1182
        %1184 = vset.pattern.permute.xlu0 14
        %1185 = vperm.xlu0 %1184, %v899
        %v1186 = vpop.permute.xlu0 %1185
        %v1188 = vmul.f32 %v1186, %v758
        %v1189 = vadd.f32 %v1181, %v1188
        %v1190 = vmul.f32 %v1186, %v926
        %v1191 = vadd.f32 %v1183, %v1190
        %1192 = vset.pattern.permute.xlu0 15
        %1193 = vperm.xlu0 %1192, %v899
        %v1194 = vpop.permute.xlu0 %1193
        %v1196 = vmul.f32 %v1194, %v804
        %v1197 = vadd.f32 %v1189, %v1196
        %v1198 = vmul.f32 %v1194, %v936
        %v1199 = vadd.f32 %v1191, %v1198
        %s1200 = scalar_lea.vmem %s13, 6
        %v1201 = vld [vmem:[%s1200] sm:$0x3]
        %v1203 = vsel %vm638, %v1197, 0
        %v1206 = vsel %vm642, %v1201, 0
        %1208 = vmatpush.msra.mxu0 0.0
        %1209 = vmatpush.msra.mxu0 0.0
        %1210 = vmatpush.msra.mxu0 0.0
        %1211 = vmatpush.msra.mxu0 0.0
        %1212 = vmatpush.msra.mxu0 0.0
        %1213 = vmatpush.msra.mxu0 0.0
        %1214 = vmatpush.msra.mxu0 0.0
        %1215 = vmatpush.msra.mxu0 0.0
        %1216 = vmatpush.msra.mxu0 0.0
        %1217 = vmatpush.msra.mxu0 0.0
        %1218 = vmatpush.msra.mxu0 0.0
        %1219 = vmatpush.msra.mxu0 0.0
        %1220 = vmatpush.msra.mxu0 0.0
        %1221 = vmatpush.msra.mxu0 0.0
        %1222 = vmatpush.msra.mxu0 0.0
        %1223 = vmatpush.msra.mxu0 %v1206
        %1224 = vmatmul.f32.gmra.mxu0 %v1203
        %v1225 = vpop.f32.mrf.mxu0
        %v1226 = vadd.f32 0.0, %v1225
        %1227 = vdwg.mxu0
        %v1228 = vadd.f32 %v1169, %v1226
        %s1229 = scalar_lea.vmem %s14, 12
        %v1230 = vld [vmem:[%s1229] sm:$0xf]
        %v1232 = vsel %vm941, %v1199, 0
        %v1235 = vsel %vm816, %v1230, 0
        %1237 = vmatpush.msra.mxu0 0.0
        %1238 = vmatpush.msra.mxu0 0.0
        %1239 = vmatpush.msra.mxu0 0.0
        %1240 = vmatpush.msra.mxu0 0.0
        %1241 = vmatpush.msra.mxu0 0.0
        %1242 = vmatpush.msra.mxu0 0.0
        %1243 = vmatpush.msra.mxu0 0.0
        %1244 = vmatpush.msra.mxu0 0.0
        %1245 = vmatpush.msra.mxu0 0.0
        %1246 = vmatpush.msra.mxu0 0.0
        %1247 = vmatpush.msra.mxu0 0.0
        %1248 = vmatpush.msra.mxu0 0.0
        %1249 = vmatpush.msra.mxu0 0.0
        %1250 = vmatpush.msra.mxu0 0.0
        %1251 = vmatpush.msra.mxu0 0.0
        %1252 = vmatpush.msra.mxu0 %v1235
        %1253 = vmatmul.f32.gmra.mxu0 %v1232
        %v1254 = vpop.f32.mrf.mxu0
        %v1255 = vadd.f32 0.0, %v1254
        %1256 = vdwg.mxu0
        %v1257 = vadd.f32 %v1228, %v1255
        %v1258 = vld [vmem:[%s15] sm:$0x1]
        %v1260 = vperm.slane %v1258, 0
        %v1262 = vadd.f32 %v1257, %v1260
        %v1263 = vmax.f32 %v1262, 0.0
        %vm1264 = vcmask 64512
        %1265 = vst.msk [vmem:[%s580] sm:$0xff] %vm1264, %v1263
        %s1266 = sand.u32 %s409, 1
        %s1267 = scalar_lea.sflag [#allocation3], %s1266
        %s1268 = sand.u32 %s409, 1
        %s1269 = smul.addr %s1268, 8
        %s1270 = scalar_lea.vmem [#allocation2], %s1269
        // Predicated region
        $region85: #{tpu_custom_call.1} parent=83 // pred_check
          %p1271 = pneg %p419
        $region86: #{tpu_custom_call.1} parent=83 // pred_check_branch
          %1273 = sbr.rel (%p1271) target = $region88
        $region87: #{tpu_custom_call.1} parent=83 // pred_region
          %1275 = vsyncadd %s1267, 0
          %s1276 = sadd.s32 %s35, %s34
          %s1277 = smul.addr %s1276, 8
          %s1278 = scalar_lea.hbm %s16, %s1277
          %s1280 = sshll.u32 %s1270, 4
          %s1281 = int_to_ptr.vmem [resolvable:$true] %s1280
          %s1282 = sshll.u32 %s1278, 4
          %s1283 = int_to_ptr.hbm [resolvable:$true] %s1282
          %1285 = dma.vmem_to_hbm [thread:$0]  %s1281, 128, %s1283, %s1267
        $region88: #{tpu_custom_call.1} parent=83 // pred_fallthru
          _
      $region84: #{tpu_custom_call.1} parent=5 // pred_fallthru
        _
      %p1286 = scmp.le.s32.totalorder 2, %s25
      // Predicated region
      $region89: #{tpu_custom_call.1} parent=5 // pred_check
        %p1287 = pneg %p1286
      $region90: #{tpu_custom_call.1} parent=5 // pred_check_branch
        %1289 = sbr.rel (%p1287) target = $region92
      $region91: #{tpu_custom_call.1} parent=5 // pred_region
        %s1290 = ssub.s32 %s25, 2
        // Predicated region
        $region93: #{tpu_custom_call.1} parent=91 // pred_check
          %p1291 = pneg %p425
        $region94: #{tpu_custom_call.1} parent=91 // pred_check_branch
          %1293 = sbr.rel (%p1291) target = $region96
        $region95: #{tpu_custom_call.1} parent=91 // pred_region
          %s1294 = sand.u32 %s410, 1
          %s1295 = scalar_lea.sflag [#allocation3], %s1294
          %s1296 = sand.u32 %s410, 1
          %s1297 = smul.addr %s1296, 8
          %s1298 = scalar_lea.vmem [#allocation2], %s1297
          %1300 = dma.done %s1295, 128
        $region96: #{tpu_custom_call.1} parent=91 // pred_fallthru
          _
      $region92: #{tpu_custom_call.1} parent=5 // pred_fallthru
        _
    $region6: #{tpu_custom_call.1} parent=1 // loop_footer
      %s29 = sadd.s32 1, %s25
    $region7: #{tpu_custom_call.1} parent=1 // loop_footer_branch
      %24 = sbr.rel target = $region3
    $region8: #{tpu_custom_call.1} parent=1 // loop_exit
      _
    %1301 = vsyncpa [#allocation3], 1
    %s1302 = scalar_lea.sflag [#allocation3], 1
    %1303 = vsyncpa %s1302, 1

</llo_original>
